<compile_context>
chip_gen: v5e
topology: v5e:2x2
jax: 0.10.0
libtpu: 0.0.40
codegen_flags: <defaults>
</compile_context>

<pallas_src>
import jax
import jax.numpy as jnp
from jax.experimental import pallas as pl
from jax.experimental.pallas import tpu as pltpu

D_IN = 200   # LSTM input size
D_H = 100    # LSTM hidden size
GP = 128     # per-gate width padded to one full 128-lane vreg
SUB = 8      # sublane granularity


def lstm_kernel(x_ref, wih_ref, whh_ref, b_ref, h0_ref, c0_ref, out_ref,
                gi_scr):
    TBP = x_ref.shape[0]         # T * B_pad (static)
    BP = h0_ref.shape[0]         # padded batch (static, multiple of 8)
    T = TBP // BP

    # Phase 0: non-recurrent input projection for ALL time steps in a single
    # (T*BP, D_IN) x (D_IN, 4*GP) MXU call, with the bias folded in.
    gi_scr[...] = (
        jnp.dot(x_ref[...], wih_ref[...], preferred_element_type=jnp.float32)
        + b_ref[...])

    whh = whh_ref[...]           # (GP, 4*GP), rows >= D_H are zero
    h = h0_ref[...]              # (BP, GP), lanes >= D_H are zero
    c = c0_ref[...]              # (BP, GP), lanes >= D_H are zero

    # T is small and static -> fully unrolled recurrence. Only per-step MXU
    # work is the (BP, GP) x (GP, 4*GP) recurrent matmul. All slices below are
    # static and (8,128)-tile aligned.
    for t in range(T):
        gates = gi_scr[pl.ds(t * BP, BP), :] + jnp.dot(
            h, whh, preferred_element_type=jnp.float32)
        # Gate slices are 128-lane aligned: pure vreg selections.
        i_g = jax.nn.sigmoid(gates[:, 0 * GP:1 * GP])
        f_g = jax.nn.sigmoid(gates[:, 1 * GP:2 * GP])
        g_g = jnp.tanh(gates[:, 2 * GP:3 * GP])
        o_g = jax.nn.sigmoid(gates[:, 3 * GP:4 * GP])
        c = f_g * c + i_g * g_g
        h = o_g * jnp.tanh(c)
        out_ref[pl.ds(t * BP, BP), :] = h.astype(out_ref.dtype)


def decoder_forward(init_y, hidden, params):
    """LSTM(200 -> 100) forward. Returns output of shape (T, B, 100)."""
    h0, c0 = hidden
    w_ih, w_hh, b_ih, b_hh = params
    T, B, _ = init_y.shape
    BP = ((B + SUB - 1) // SUB) * SUB            # batch padded to sublane mult.
    f32 = jnp.float32

    w_ih_t = jnp.transpose(w_ih).astype(f32)     # (D_IN, 4*D_H)
    w_hh_t = jnp.transpose(w_hh).astype(f32)     # (D_H, 4*D_H)
    bias = (b_ih + b_hh).astype(f32)             # (4*D_H,)

    # Re-lay weights/bias so gate k occupies lane-aligned columns
    # [k*GP, k*GP + D_H) of a 4*GP = 512-wide matrix; pad hidden rows to GP.
    wih_p = jnp.zeros((D_IN, 4 * GP), f32)
    whh_p = jnp.zeros((GP, 4 * GP), f32)
    b_p = jnp.zeros((1, 4 * GP), f32)
    for k in range(4):
        wih_p = wih_p.at[:, k * GP:k * GP + D_H].set(
            w_ih_t[:, k * D_H:(k + 1) * D_H])
        whh_p = whh_p.at[:D_H, k * GP:k * GP + D_H].set(
            w_hh_t[:, k * D_H:(k + 1) * D_H])
        b_p = b_p.at[0, k * GP:k * GP + D_H].set(bias[k * D_H:(k + 1) * D_H])

    h0_p = jnp.zeros((BP, GP), f32).at[:B, :D_H].set(h0[0].astype(f32))
    c0_p = jnp.zeros((BP, GP), f32).at[:B, :D_H].set(c0[0].astype(f32))

    # Pad batch so each time step owns a sublane-aligned block of BP rows.
    x_p = jnp.zeros((T, BP, D_IN), f32).at[:, :B, :].set(init_y.astype(f32))
    x2d = x_p.reshape(T * BP, D_IN)

    grid_spec = pltpu.PrefetchScalarGridSpec(
        num_scalar_prefetch=0,
        grid=(1,),                               # single invocation
        in_specs=[
            pl.BlockSpec((T * BP, D_IN), lambda i: (0, 0)),   # all x_t
            pl.BlockSpec((D_IN, 4 * GP), lambda i: (0, 0)),   # W_ih^T (padded)
            pl.BlockSpec((GP, 4 * GP), lambda i: (0, 0)),     # W_hh^T (padded)
            pl.BlockSpec((1, 4 * GP), lambda i: (0, 0)),      # bias   (padded)
            pl.BlockSpec((BP, GP), lambda i: (0, 0)),         # h0     (padded)
            pl.BlockSpec((BP, GP), lambda i: (0, 0)),         # c0     (padded)
        ],
        out_specs=pl.BlockSpec((T * BP, GP), lambda i: (0, 0)),
        scratch_shapes=[
            pltpu.VMEM((T * BP, 4 * GP), jnp.float32),  # precomputed x-proj
        ],
    )

    out2d = pl.pallas_call(
        lstm_kernel,
        out_shape=jax.ShapeDtypeStruct((T * BP, GP), jnp.float32),
        grid_spec=grid_spec,
        compiler_params=pltpu.CompilerParams(
            dimension_semantics=("arbitrary",)),
    )(x2d, wih_p, whh_p, b_p, h0_p, c0_p)

    # Lane-dense (T*BP, 128) kernel output -> (T, B, 100) module output.
    return out2d.reshape(T, BP, GP)[:, :B, :D_H]


def decoder_forward_ref(init_y, hidden, params):
    """Pure-JAX reference (lax.scan) matching torch.nn.LSTM semantics."""
    h0, c0 = hidden
    w_ih, w_hh, b_ih, b_hh = params

    def step(carry, x):
        h, c = carry
        gates = x @ w_ih.T + b_ih + h @ w_hh.T + b_hh
        i, f, g, o = jnp.split(gates, 4, axis=-1)
        i = jax.nn.sigmoid(i)
        f = jax.nn.sigmoid(f)
        g = jnp.tanh(g)
        o = jax.nn.sigmoid(o)
        c_new = f * c + i * g
        h_new = o * jnp.tanh(c_new)
        return (h_new, c_new), h_new

    (_, _), out = jax.lax.scan(step, (h0[0], c0[0]), init_y)
    return out


if __name__ == "__main__":
    key = jax.random.PRNGKey(0)
    T, B = 8, 4   # small shapes: seq=8, batch=4

    k1, k2, k3, k4, k5, k6, k7, _ = jax.random.split(key, 8)

    # Deterministic parameter init (PyTorch LSTM default: U(-1/sqrt(H), 1/sqrt(H))).
    bound = 1.0 / jnp.sqrt(jnp.float32(D_H))
    w_ih = jax.random.uniform(k1, (4 * D_H, D_IN), jnp.float32, -bound, bound)
    w_hh = jax.random.uniform(k2, (4 * D_H, D_H), jnp.float32, -bound, bound)
    b_ih = jax.random.uniform(k3, (4 * D_H,), jnp.float32, -bound, bound)
    b_hh = jax.random.uniform(k4, (4 * D_H,), jnp.float32, -bound, bound)
    params = (w_ih, w_hh, b_ih, b_hh)

    init_y = jax.random.normal(k5, (T, B, D_IN), jnp.float32)
    h0 = jax.random.normal(k6, (1, B, D_H), jnp.float32)
    c0 = jax.random.normal(k7, (1, B, D_H), jnp.float32)

    out = decoder_forward(init_y, (h0, c0), params)
    out = jax.block_until_ready(out)

    ref = decoder_forward_ref(init_y, (h0, c0), params)
    assert out.shape == (T, B, D_H)
    assert jnp.allclose(out, ref, atol=1e-4, rtol=1e-4), "mismatch vs reference"

    print("KERNEL_OK")
</pallas_src>

<mosaic_0001>
module attributes {stable_mosaic.version = 11 : i64} {
  func.func @lstm_kernel(%arg0: i32, %arg1: memref<64x200xf32, #tpu.memory_space<vmem>>, %arg2: memref<200x512xf32, #tpu.memory_space<vmem>>, %arg3: memref<128x512xf32, #tpu.memory_space<vmem>>, %arg4: memref<1x512xf32, #tpu.memory_space<vmem>>, %arg5: memref<8x128xf32, #tpu.memory_space<vmem>>, %arg6: memref<8x128xf32, #tpu.memory_space<vmem>>, %arg7: memref<64x128xf32, #tpu.memory_space<vmem>>, %arg8: memref<64x512xf32, #tpu.memory_space<vmem>>) attributes {dimension_semantics = [#tpu.dimension_semantics<arbitrary>], iteration_bounds = array<i64: 1>, scalar_prefetch = 0 : i64, scratch_operands = 1 : i64, tpu.core_type = #tpu.core_type<tc>, window_params = [{pipeline_mode = #tpu.pipeline_mode<synchronous>, transform_indices = @transform_0, window_bounds = array<i64: 64, 200>}, {pipeline_mode = #tpu.pipeline_mode<synchronous>, transform_indices = @transform_1, window_bounds = array<i64: 200, 512>}, {pipeline_mode = #tpu.pipeline_mode<synchronous>, transform_indices = @transform_2, window_bounds = array<i64: 128, 512>}, {pipeline_mode = #tpu.pipeline_mode<synchronous>, transform_indices = @transform_3, window_bounds = array<i64: 1, 512>}, {pipeline_mode = #tpu.pipeline_mode<synchronous>, transform_indices = @transform_4, window_bounds = array<i64: 8, 128>}, {pipeline_mode = #tpu.pipeline_mode<synchronous>, transform_indices = @transform_5, window_bounds = array<i64: 8, 128>}, {pipeline_mode = #tpu.pipeline_mode<synchronous>, transform_indices = @transform_6, window_bounds = array<i64: 64, 128>}]} {
    %c0 = arith.constant 0 : index
    %c0_0 = arith.constant 0 : index
    %0 = vector.load %arg1[%c0, %c0_0] : memref<64x200xf32, #tpu.memory_space<vmem>>, vector<64x200xf32>
    %c0_1 = arith.constant 0 : index
    %c0_2 = arith.constant 0 : index
    %1 = vector.load %arg2[%c0_1, %c0_2] : memref<200x512xf32, #tpu.memory_space<vmem>>, vector<200x512xf32>
    %cst = arith.constant dense<0.000000e+00> : vector<64x512xf32>
    %2 = tpu.matmul %0, %1, %cst {dimension_numbers = #tpu.dot_dimension_numbers<[1], [0], [0], [1], [0, 0, 1, 1], [], []>} : vector<64x200xf32>, vector<200x512xf32>, vector<64x512xf32> -> vector<64x512xf32>
    %c0_3 = arith.constant 0 : index
    %c0_4 = arith.constant 0 : index
    %3 = vector.load %arg4[%c0_3, %c0_4] : memref<1x512xf32, #tpu.memory_space<vmem>>, vector<1x512xf32>
    %4 = vector.broadcast %3 : vector<1x512xf32> to vector<64x512xf32>
    %5 = arith.addf %2, %4 : vector<64x512xf32>
    %c0_5 = arith.constant 0 : index
    %c0_6 = arith.constant 0 : index
    %6 = vector.load %arg8[%c0_5, %c0_6] : memref<64x512xf32, #tpu.memory_space<vmem>>, vector<64x512xf32>
    tpu.vector_store %arg8[%c0_5, %c0_6], %5 {strides = array<i32>} : memref<64x512xf32, #tpu.memory_space<vmem>>, vector<64x512xf32>,
    %c0_7 = arith.constant 0 : index
    %c0_8 = arith.constant 0 : index
    %7 = vector.load %arg3[%c0_7, %c0_8] : memref<128x512xf32, #tpu.memory_space<vmem>>, vector<128x512xf32>
    %c0_9 = arith.constant 0 : index
    %c0_10 = arith.constant 0 : index
    %8 = vector.load %arg5[%c0_9, %c0_10] : memref<8x128xf32, #tpu.memory_space<vmem>>, vector<8x128xf32>
    %c0_11 = arith.constant 0 : index
    %c0_12 = arith.constant 0 : index
    %9 = vector.load %arg6[%c0_11, %c0_12] : memref<8x128xf32, #tpu.memory_space<vmem>>, vector<8x128xf32>
    %c0_13 = arith.constant 0 : index
    %c0_14 = arith.constant 0 : index
    %10 = vector.load %arg8[%c0_13, %c0_14] : memref<64x512xf32, #tpu.memory_space<vmem>>, vector<8x512xf32>
    %cst_15 = arith.constant dense<0.000000e+00> : vector<8x512xf32>
    %11 = tpu.matmul %8, %7, %cst_15 {dimension_numbers = #tpu.dot_dimension_numbers<[1], [0], [0], [1], [0, 0, 1, 1], [], []>} : vector<8x128xf32>, vector<128x512xf32>, vector<8x512xf32> -> vector<8x512xf32>
    %12 = arith.addf %10, %11 : vector<8x512xf32>
    %13 = vector.extract_strided_slice %12 {offsets = [0, 0], sizes = [8, 128], strides = [1, 1]} : vector<8x512xf32> to vector<8x128xf32>
    %14 = arith.negf %13 : vector<8x128xf32>
    %15 = math.exp %14 : vector<8x128xf32>
    %cst_16 = arith.constant 1.000000e+00 : f32
    %16 = vector.broadcast %cst_16 : f32 to vector<8x128xf32>
    %17 = arith.addf %16, %15 : vector<8x128xf32>
    %18 = arith.divf %16, %17 : vector<8x128xf32>
    %19 = vector.extract_strided_slice %12 {offsets = [0, 128], sizes = [8, 128], strides = [1, 1]} : vector<8x512xf32> to vector<8x128xf32>
    %20 = arith.negf %19 : vector<8x128xf32>
    %21 = math.exp %20 : vector<8x128xf32>
    %cst_17 = arith.constant 1.000000e+00 : f32
    %22 = vector.broadcast %cst_17 : f32 to vector<8x128xf32>
    %23 = arith.addf %22, %21 : vector<8x128xf32>
    %24 = arith.divf %22, %23 : vector<8x128xf32>
    %25 = vector.extract_strided_slice %12 {offsets = [0, 256], sizes = [8, 128], strides = [1, 1]} : vector<8x512xf32> to vector<8x128xf32>
    %26 = math.tanh %25 : vector<8x128xf32>
    %27 = vector.extract_strided_slice %12 {offsets = [0, 384], sizes = [8, 128], strides = [1, 1]} : vector<8x512xf32> to vector<8x128xf32>
    %28 = arith.negf %27 : vector<8x128xf32>
    %29 = math.exp %28 : vector<8x128xf32>
    %cst_18 = arith.constant 1.000000e+00 : f32
    %30 = vector.broadcast %cst_18 : f32 to vector<8x128xf32>
    %31 = arith.addf %30, %29 : vector<8x128xf32>
    %32 = arith.divf %30, %31 : vector<8x128xf32>
    %33 = arith.mulf %24, %9 : vector<8x128xf32>
    %34 = arith.mulf %18, %26 : vector<8x128xf32>
    %35 = arith.addf %33, %34 : vector<8x128xf32>
    %36 = math.tanh %35 : vector<8x128xf32>
    %37 = arith.mulf %32, %36 : vector<8x128xf32>
    %c0_19 = arith.constant 0 : index
    %c0_20 = arith.constant 0 : index
    %38 = vector.load %arg7[%c0_19, %c0_20] : memref<64x128xf32, #tpu.memory_space<vmem>>, vector<8x128xf32>
    tpu.vector_store %arg7[%c0_19, %c0_20], %37 {strides = array<i32>} : memref<64x128xf32, #tpu.memory_space<vmem>>, vector<8x128xf32>,
    %c8 = arith.constant 8 : index
    %c0_21 = arith.constant 0 : index
    %39 = vector.load %arg8[%c8, %c0_21] : memref<64x512xf32, #tpu.memory_space<vmem>>, vector<8x512xf32>
    %cst_22 = arith.constant dense<0.000000e+00> : vector<8x512xf32>
    %40 = tpu.matmul %37, %7, %cst_22 {dimension_numbers = #tpu.dot_dimension_numbers<[1], [0], [0], [1], [0, 0, 1, 1], [], []>} : vector<8x128xf32>, vector<128x512xf32>, vector<8x512xf32> -> vector<8x512xf32>
    %41 = arith.addf %39, %40 : vector<8x512xf32>
    %42 = vector.extract_strided_slice %41 {offsets = [0, 0], sizes = [8, 128], strides = [1, 1]} : vector<8x512xf32> to vector<8x128xf32>
    %43 = arith.negf %42 : vector<8x128xf32>
    %44 = math.exp %43 : vector<8x128xf32>
    %cst_23 = arith.constant 1.000000e+00 : f32
    %45 = vector.broadcast %cst_23 : f32 to vector<8x128xf32>
    %46 = arith.addf %45, %44 : vector<8x128xf32>
    %47 = arith.divf %45, %46 : vector<8x128xf32>
    %48 = vector.extract_strided_slice %41 {offsets = [0, 128], sizes = [8, 128], strides = [1, 1]} : vector<8x512xf32> to vector<8x128xf32>
    %49 = arith.negf %48 : vector<8x128xf32>
    %50 = math.exp %49 : vector<8x128xf32>
    %cst_24 = arith.constant 1.000000e+00 : f32
    %51 = vector.broadcast %cst_24 : f32 to vector<8x128xf32>
    %52 = arith.addf %51, %50 : vector<8x128xf32>
    %53 = arith.divf %51, %52 : vector<8x128xf32>
    %54 = vector.extract_strided_slice %41 {offsets = [0, 256], sizes = [8, 128], strides = [1, 1]} : vector<8x512xf32> to vector<8x128xf32>
    %55 = math.tanh %54 : vector<8x128xf32>
    %56 = vector.extract_strided_slice %41 {offsets = [0, 384], sizes = [8, 128], strides = [1, 1]} : vector<8x512xf32> to vector<8x128xf32>
    %57 = arith.negf %56 : vector<8x128xf32>
    %58 = math.exp %57 : vector<8x128xf32>
    %cst_25 = arith.constant 1.000000e+00 : f32
    %59 = vector.broadcast %cst_25 : f32 to vector<8x128xf32>
    %60 = arith.addf %59, %58 : vector<8x128xf32>
    %61 = arith.divf %59, %60 : vector<8x128xf32>
    %62 = arith.mulf %53, %35 : vector<8x128xf32>
    %63 = arith.mulf %47, %55 : vector<8x128xf32>
    %64 = arith.addf %62, %63 : vector<8x128xf32>
    %65 = math.tanh %64 : vector<8x128xf32>
    %66 = arith.mulf %61, %65 : vector<8x128xf32>
    %c8_26 = arith.constant 8 : index
    %c0_27 = arith.constant 0 : index
    %67 = vector.load %arg7[%c8_26, %c0_27] : memref<64x128xf32, #tpu.memory_space<vmem>>, vector<8x128xf32>
    tpu.vector_store %arg7[%c8_26, %c0_27], %66 {strides = array<i32>} : memref<64x128xf32, #tpu.memory_space<vmem>>, vector<8x128xf32>,
    %c16 = arith.constant 16 : index
    %c0_28 = arith.constant 0 : index
    %68 = vector.load %arg8[%c16, %c0_28] : memref<64x512xf32, #tpu.memory_space<vmem>>, vector<8x512xf32>
    %cst_29 = arith.constant dense<0.000000e+00> : vector<8x512xf32>
    %69 = tpu.matmul %66, %7, %cst_29 {dimension_numbers = #tpu.dot_dimension_numbers<[1], [0], [0], [1], [0, 0, 1, 1], [], []>} : vector<8x128xf32>, vector<128x512xf32>, vector<8x512xf32> -> vector<8x512xf32>
    %70 = arith.addf %68, %69 : vector<8x512xf32>
    %71 = vector.extract_strided_slice %70 {offsets = [0, 0], sizes = [8, 128], strides = [1, 1]} : vector<8x512xf32> to vector<8x128xf32>
    %72 = arith.negf %71 : vector<8x128xf32>
    %73 = math.exp %72 : vector<8x128xf32>
    %cst_30 = arith.constant 1.000000e+00 : f32
    %74 = vector.broadcast %cst_30 : f32 to vector<8x128xf32>
    %75 = arith.addf %74, %73 : vector<8x128xf32>
    %76 = arith.divf %74, %75 : vector<8x128xf32>
    %77 = vector.extract_strided_slice %70 {offsets = [0, 128], sizes = [8, 128], strides = [1, 1]} : vector<8x512xf32> to vector<8x128xf32>
    %78 = arith.negf %77 : vector<8x128xf32>
    %79 = math.exp %78 : vector<8x128xf32>
    %cst_31 = arith.constant 1.000000e+00 : f32
    %80 = vector.broadcast %cst_31 : f32 to vector<8x128xf32>
    %81 = arith.addf %80, %79 : vector<8x128xf32>
    %82 = arith.divf %80, %81 : vector<8x128xf32>
    %83 = vector.extract_strided_slice %70 {offsets = [0, 256], sizes = [8, 128], strides = [1, 1]} : vector<8x512xf32> to vector<8x128xf32>
    %84 = math.tanh %83 : vector<8x128xf32>
    %85 = vector.extract_strided_slice %70 {offsets = [0, 384], sizes = [8, 128], strides = [1, 1]} : vector<8x512xf32> to vector<8x128xf32>
    %86 = arith.negf %85 : vector<8x128xf32>
    %87 = math.exp %86 : vector<8x128xf32>
    %cst_32 = arith.constant 1.000000e+00 : f32
    %88 = vector.broadcast %cst_32 : f32 to vector<8x128xf32>
    %89 = arith.addf %88, %87 : vector<8x128xf32>
    %90 = arith.divf %88, %89 : vector<8x128xf32>
    %91 = arith.mulf %82, %64 : vector<8x128xf32>
    %92 = arith.mulf %76, %84 : vector<8x128xf32>
    %93 = arith.addf %91, %92 : vector<8x128xf32>
    %94 = math.tanh %93 : vector<8x128xf32>
    %95 = arith.mulf %90, %94 : vector<8x128xf32>
    %c16_33 = arith.constant 16 : index
    %c0_34 = arith.constant 0 : index
    %96 = vector.load %arg7[%c16_33, %c0_34] : memref<64x128xf32, #tpu.memory_space<vmem>>, vector<8x128xf32>
    tpu.vector_store %arg7[%c16_33, %c0_34], %95 {strides = array<i32>} : memref<64x128xf32, #tpu.memory_space<vmem>>, vector<8x128xf32>,
    %c24 = arith.constant 24 : index
    %c0_35 = arith.constant 0 : index
    %97 = vector.load %arg8[%c24, %c0_35] : memref<64x512xf32, #tpu.memory_space<vmem>>, vector<8x512xf32>
    %cst_36 = arith.constant dense<0.000000e+00> : vector<8x512xf32>
    %98 = tpu.matmul %95, %7, %cst_36 {dimension_numbers = #tpu.dot_dimension_numbers<[1], [0], [0], [1], [0, 0, 1, 1], [], []>} : vector<8x128xf32>, vector<128x512xf32>, vector<8x512xf32> -> vector<8x512xf32>
    %99 = arith.addf %97, %98 : vector<8x512xf32>
    %100 = vector.extract_strided_slice %99 {offsets = [0, 0], sizes = [8, 128], strides = [1, 1]} : vector<8x512xf32> to vector<8x128xf32>
    %101 = arith.negf %100 : vector<8x128xf32>
    %102 = math.exp %101 : vector<8x128xf32>
    %cst_37 = arith.constant 1.000000e+00 : f32
    %103 = vector.broadcast %cst_37 : f32 to vector<8x128xf32>
    %104 = arith.addf %103, %102 : vector<8x128xf32>
    %105 = arith.divf %103, %104 : vector<8x128xf32>
    %106 = vector.extract_strided_slice %99 {offsets = [0, 128], sizes = [8, 128], strides = [1, 1]} : vector<8x512xf32> to vector<8x128xf32>
    %107 = arith.negf %106 : vector<8x128xf32>
    %108 = math.exp %107 : vector<8x128xf32>
    %cst_38 = arith.constant 1.000000e+00 : f32
    %109 = vector.broadcast %cst_38 : f32 to vector<8x128xf32>
    %110 = arith.addf %109, %108 : vector<8x128xf32>
    %111 = arith.divf %109, %110 : vector<8x128xf32>
    %112 = vector.extract_strided_slice %99 {offsets = [0, 256], sizes = [8, 128], strides = [1, 1]} : vector<8x512xf32> to vector<8x128xf32>
    %113 = math.tanh %112 : vector<8x128xf32>
    %114 = vector.extract_strided_slice %99 {offsets = [0, 384], sizes = [8, 128], strides = [1, 1]} : vector<8x512xf32> to vector<8x128xf32>
    %115 = arith.negf %114 : vector<8x128xf32>
    %116 = math.exp %115 : vector<8x128xf32>
    %cst_39 = arith.constant 1.000000e+00 : f32
    %117 = vector.broadcast %cst_39 : f32 to vector<8x128xf32>
    %118 = arith.addf %117, %116 : vector<8x128xf32>
    %119 = arith.divf %117, %118 : vector<8x128xf32>
    %120 = arith.mulf %111, %93 : vector<8x128xf32>
    %121 = arith.mulf %105, %113 : vector<8x128xf32>
    %122 = arith.addf %120, %121 : vector<8x128xf32>
    %123 = math.tanh %122 : vector<8x128xf32>
    %124 = arith.mulf %119, %123 : vector<8x128xf32>
    %c24_40 = arith.constant 24 : index
    %c0_41 = arith.constant 0 : index
    %125 = vector.load %arg7[%c24_40, %c0_41] : memref<64x128xf32, #tpu.memory_space<vmem>>, vector<8x128xf32>
    tpu.vector_store %arg7[%c24_40, %c0_41], %124 {strides = array<i32>} : memref<64x128xf32, #tpu.memory_space<vmem>>, vector<8x128xf32>,
    %c32 = arith.constant 32 : index
    %c0_42 = arith.constant 0 : index
    %126 = vector.load %arg8[%c32, %c0_42] : memref<64x512xf32, #tpu.memory_space<vmem>>, vector<8x512xf32>
    %cst_43 = arith.constant dense<0.000000e+00> : vector<8x512xf32>
    %127 = tpu.matmul %124, %7, %cst_43 {dimension_numbers = #tpu.dot_dimension_numbers<[1], [0], [0], [1], [0, 0, 1, 1], [], []>} : vector<8x128xf32>, vector<128x512xf32>, vector<8x512xf32> -> vector<8x512xf32>
    %128 = arith.addf %126, %127 : vector<8x512xf32>
    %129 = vector.extract_strided_slice %128 {offsets = [0, 0], sizes = [8, 128], strides = [1, 1]} : vector<8x512xf32> to vector<8x128xf32>
    %130 = arith.negf %129 : vector<8x128xf32>
    %131 = math.exp %130 : vector<8x128xf32>
    %cst_44 = arith.constant 1.000000e+00 : f32
    %132 = vector.broadcast %cst_44 : f32 to vector<8x128xf32>
    %133 = arith.addf %132, %131 : vector<8x128xf32>
    %134 = arith.divf %132, %133 : vector<8x128xf32>
    %135 = vector.extract_strided_slice %128 {offsets = [0, 128], sizes = [8, 128], strides = [1, 1]} : vector<8x512xf32> to vector<8x128xf32>
    %136 = arith.negf %135 : vector<8x128xf32>
    %137 = math.exp %136 : vector<8x128xf32>
    %cst_45 = arith.constant 1.000000e+00 : f32
    %138 = vector.broadcast %cst_45 : f32 to vector<8x128xf32>
    %139 = arith.addf %138, %137 : vector<8x128xf32>
    %140 = arith.divf %138, %139 : vector<8x128xf32>
    %141 = vector.extract_strided_slice %128 {offsets = [0, 256], sizes = [8, 128], strides = [1, 1]} : vector<8x512xf32> to vector<8x128xf32>
    %142 = math.tanh %141 : vector<8x128xf32>
    %143 = vector.extract_strided_slice %128 {offsets = [0, 384], sizes = [8, 128], strides = [1, 1]} : vector<8x512xf32> to vector<8x128xf32>
    %144 = arith.negf %143 : vector<8x128xf32>
    %145 = math.exp %144 : vector<8x128xf32>
    %cst_46 = arith.constant 1.000000e+00 : f32
    %146 = vector.broadcast %cst_46 : f32 to vector<8x128xf32>
    %147 = arith.addf %146, %145 : vector<8x128xf32>
    %148 = arith.divf %146, %147 : vector<8x128xf32>
    %149 = arith.mulf %140, %122 : vector<8x128xf32>
    %150 = arith.mulf %134, %142 : vector<8x128xf32>
    %151 = arith.addf %149, %150 : vector<8x128xf32>
    %152 = math.tanh %151 : vector<8x128xf32>
    %153 = arith.mulf %148, %152 : vector<8x128xf32>
    %c32_47 = arith.constant 32 : index
    %c0_48 = arith.constant 0 : index
    %154 = vector.load %arg7[%c32_47, %c0_48] : memref<64x128xf32, #tpu.memory_space<vmem>>, vector<8x128xf32>
    tpu.vector_store %arg7[%c32_47, %c0_48], %153 {strides = array<i32>} : memref<64x128xf32, #tpu.memory_space<vmem>>, vector<8x128xf32>,
    %c40 = arith.constant 40 : index
    %c0_49 = arith.constant 0 : index
    %155 = vector.load %arg8[%c40, %c0_49] : memref<64x512xf32, #tpu.memory_space<vmem>>, vector<8x512xf32>
    %cst_50 = arith.constant dense<0.000000e+00> : vector<8x512xf32>
    %156 = tpu.matmul %153, %7, %cst_50 {dimension_numbers = #tpu.dot_dimension_numbers<[1], [0], [0], [1], [0, 0, 1, 1], [], []>} : vector<8x128xf32>, vector<128x512xf32>, vector<8x512xf32> -> vector<8x512xf32>
    %157 = arith.addf %155, %156 : vector<8x512xf32>
    %158 = vector.extract_strided_slice %157 {offsets = [0, 0], sizes = [8, 128], strides = [1, 1]} : vector<8x512xf32> to vector<8x128xf32>
    %159 = arith.negf %158 : vector<8x128xf32>
    %160 = math.exp %159 : vector<8x128xf32>
    %cst_51 = arith.constant 1.000000e+00 : f32
    %161 = vector.broadcast %cst_51 : f32 to vector<8x128xf32>
    %162 = arith.addf %161, %160 : vector<8x128xf32>
    %163 = arith.divf %161, %162 : vector<8x128xf32>
    %164 = vector.extract_strided_slice %157 {offsets = [0, 128], sizes = [8, 128], strides = [1, 1]} : vector<8x512xf32> to vector<8x128xf32>
    %165 = arith.negf %164 : vector<8x128xf32>
    %166 = math.exp %165 : vector<8x128xf32>
    %cst_52 = arith.constant 1.000000e+00 : f32
    %167 = vector.broadcast %cst_52 : f32 to vector<8x128xf32>
    %168 = arith.addf %167, %166 : vector<8x128xf32>
    %169 = arith.divf %167, %168 : vector<8x128xf32>
    %170 = vector.extract_strided_slice %157 {offsets = [0, 256], sizes = [8, 128], strides = [1, 1]} : vector<8x512xf32> to vector<8x128xf32>
    %171 = math.tanh %170 : vector<8x128xf32>
    %172 = vector.extract_strided_slice %157 {offsets = [0, 384], sizes = [8, 128], strides = [1, 1]} : vector<8x512xf32> to vector<8x128xf32>
    %173 = arith.negf %172 : vector<8x128xf32>
    %174 = math.exp %173 : vector<8x128xf32>
    %cst_53 = arith.constant 1.000000e+00 : f32
    %175 = vector.broadcast %cst_53 : f32 to vector<8x128xf32>
    %176 = arith.addf %175, %174 : vector<8x128xf32>
    %177 = arith.divf %175, %176 : vector<8x128xf32>
    %178 = arith.mulf %169, %151 : vector<8x128xf32>
    %179 = arith.mulf %163, %171 : vector<8x128xf32>
    %180 = arith.addf %178, %179 : vector<8x128xf32>
    %181 = math.tanh %180 : vector<8x128xf32>
    %182 = arith.mulf %177, %181 : vector<8x128xf32>
    %c40_54 = arith.constant 40 : index
    %c0_55 = arith.constant 0 : index
    %183 = vector.load %arg7[%c40_54, %c0_55] : memref<64x128xf32, #tpu.memory_space<vmem>>, vector<8x128xf32>
    tpu.vector_store %arg7[%c40_54, %c0_55], %182 {strides = array<i32>} : memref<64x128xf32, #tpu.memory_space<vmem>>, vector<8x128xf32>,
    %c48 = arith.constant 48 : index
    %c0_56 = arith.constant 0 : index
    %184 = vector.load %arg8[%c48, %c0_56] : memref<64x512xf32, #tpu.memory_space<vmem>>, vector<8x512xf32>
    %cst_57 = arith.constant dense<0.000000e+00> : vector<8x512xf32>
    %185 = tpu.matmul %182, %7, %cst_57 {dimension_numbers = #tpu.dot_dimension_numbers<[1], [0], [0], [1], [0, 0, 1, 1], [], []>} : vector<8x128xf32>, vector<128x512xf32>, vector<8x512xf32> -> vector<8x512xf32>
    %186 = arith.addf %184, %185 : vector<8x512xf32>
    %187 = vector.extract_strided_slice %186 {offsets = [0, 0], sizes = [8, 128], strides = [1, 1]} : vector<8x512xf32> to vector<8x128xf32>
    %188 = arith.negf %187 : vector<8x128xf32>
    %189 = math.exp %188 : vector<8x128xf32>
    %cst_58 = arith.constant 1.000000e+00 : f32
    %190 = vector.broadcast %cst_58 : f32 to vector<8x128xf32>
    %191 = arith.addf %190, %189 : vector<8x128xf32>
    %192 = arith.divf %190, %191 : vector<8x128xf32>
    %193 = vector.extract_strided_slice %186 {offsets = [0, 128], sizes = [8, 128], strides = [1, 1]} : vector<8x512xf32> to vector<8x128xf32>
    %194 = arith.negf %193 : vector<8x128xf32>
    %195 = math.exp %194 : vector<8x128xf32>
    %cst_59 = arith.constant 1.000000e+00 : f32
    %196 = vector.broadcast %cst_59 : f32 to vector<8x128xf32>
    %197 = arith.addf %196, %195 : vector<8x128xf32>
    %198 = arith.divf %196, %197 : vector<8x128xf32>
    %199 = vector.extract_strided_slice %186 {offsets = [0, 256], sizes = [8, 128], strides = [1, 1]} : vector<8x512xf32> to vector<8x128xf32>
    %200 = math.tanh %199 : vector<8x128xf32>
    %201 = vector.extract_strided_slice %186 {offsets = [0, 384], sizes = [8, 128], strides = [1, 1]} : vector<8x512xf32> to vector<8x128xf32>
    %202 = arith.negf %201 : vector<8x128xf32>
    %203 = math.exp %202 : vector<8x128xf32>
    %cst_60 = arith.constant 1.000000e+00 : f32
    %204 = vector.broadcast %cst_60 : f32 to vector<8x128xf32>
    %205 = arith.addf %204, %203 : vector<8x128xf32>
    %206 = arith.divf %204, %205 : vector<8x128xf32>
    %207 = arith.mulf %198, %180 : vector<8x128xf32>
    %208 = arith.mulf %192, %200 : vector<8x128xf32>
    %209 = arith.addf %207, %208 : vector<8x128xf32>
    %210 = math.tanh %209 : vector<8x128xf32>
    %211 = arith.mulf %206, %210 : vector<8x128xf32>
    %c48_61 = arith.constant 48 : index
    %c0_62 = arith.constant 0 : index
    %212 = vector.load %arg7[%c48_61, %c0_62] : memref<64x128xf32, #tpu.memory_space<vmem>>, vector<8x128xf32>
    tpu.vector_store %arg7[%c48_61, %c0_62], %211 {strides = array<i32>} : memref<64x128xf32, #tpu.memory_space<vmem>>, vector<8x128xf32>,
    %c56 = arith.constant 56 : index
    %c0_63 = arith.constant 0 : index
    %213 = vector.load %arg8[%c56, %c0_63] : memref<64x512xf32, #tpu.memory_space<vmem>>, vector<8x512xf32>
    %cst_64 = arith.constant dense<0.000000e+00> : vector<8x512xf32>
    %214 = tpu.matmul %211, %7, %cst_64 {dimension_numbers = #tpu.dot_dimension_numbers<[1], [0], [0], [1], [0, 0, 1, 1], [], []>} : vector<8x128xf32>, vector<128x512xf32>, vector<8x512xf32> -> vector<8x512xf32>
    %215 = arith.addf %213, %214 : vector<8x512xf32>
    %216 = vector.extract_strided_slice %215 {offsets = [0, 0], sizes = [8, 128], strides = [1, 1]} : vector<8x512xf32> to vector<8x128xf32>
    %217 = arith.negf %216 : vector<8x128xf32>
    %218 = math.exp %217 : vector<8x128xf32>
    %cst_65 = arith.constant 1.000000e+00 : f32
    %219 = vector.broadcast %cst_65 : f32 to vector<8x128xf32>
    %220 = arith.addf %219, %218 : vector<8x128xf32>
    %221 = arith.divf %219, %220 : vector<8x128xf32>
    %222 = vector.extract_strided_slice %215 {offsets = [0, 128], sizes = [8, 128], strides = [1, 1]} : vector<8x512xf32> to vector<8x128xf32>
    %223 = arith.negf %222 : vector<8x128xf32>
    %224 = math.exp %223 : vector<8x128xf32>
    %cst_66 = arith.constant 1.000000e+00 : f32
    %225 = vector.broadcast %cst_66 : f32 to vector<8x128xf32>
    %226 = arith.addf %225, %224 : vector<8x128xf32>
    %227 = arith.divf %225, %226 : vector<8x128xf32>
    %228 = vector.extract_strided_slice %215 {offsets = [0, 256], sizes = [8, 128], strides = [1, 1]} : vector<8x512xf32> to vector<8x128xf32>
    %229 = math.tanh %228 : vector<8x128xf32>
    %230 = vector.extract_strided_slice %215 {offsets = [0, 384], sizes = [8, 128], strides = [1, 1]} : vector<8x512xf32> to vector<8x128xf32>
    %231 = arith.negf %230 : vector<8x128xf32>
    %232 = math.exp %231 : vector<8x128xf32>
    %cst_67 = arith.constant 1.000000e+00 : f32
    %233 = vector.broadcast %cst_67 : f32 to vector<8x128xf32>
    %234 = arith.addf %233, %232 : vector<8x128xf32>
    %235 = arith.divf %233, %234 : vector<8x128xf32>
    %236 = arith.mulf %227, %209 : vector<8x128xf32>
    %237 = arith.mulf %221, %229 : vector<8x128xf32>
    %238 = arith.addf %236, %237 : vector<8x128xf32>
    %239 = math.tanh %238 : vector<8x128xf32>
    %240 = arith.mulf %235, %239 : vector<8x128xf32>
    %c56_68 = arith.constant 56 : index
    %c0_69 = arith.constant 0 : index
    %241 = vector.load %arg7[%c56_68, %c0_69] : memref<64x128xf32, #tpu.memory_space<vmem>>, vector<8x128xf32>
    tpu.vector_store %arg7[%c56_68, %c0_69], %240 {strides = array<i32>} : memref<64x128xf32, #tpu.memory_space<vmem>>, vector<8x128xf32>,
    return
  }
  func.func @transform_0(%arg0: i32) -> (i32, i32) {
    %c0_i32 = arith.constant 0 : i32
    %c0_i32_0 = arith.constant 0 : i32
    %c0_i32_1 = arith.constant 0 : i32
    return %c0_i32, %c0_i32_0 : i32, i32
  }
  func.func @transform_1(%arg0: i32) -> (i32, i32) {
    %c0_i32 = arith.constant 0 : i32
    %c0_i32_0 = arith.constant 0 : i32
    %c0_i32_1 = arith.constant 0 : i32
    return %c0_i32, %c0_i32_0 : i32, i32
  }
  func.func @transform_2(%arg0: i32) -> (i32, i32) {
    %c0_i32 = arith.constant 0 : i32
    %c0_i32_0 = arith.constant 0 : i32
    %c0_i32_1 = arith.constant 0 : i32
    return %c0_i32, %c0_i32_0 : i32, i32
  }
  func.func @transform_3(%arg0: i32) -> (i32, i32) {
    %c0_i32 = arith.constant 0 : i32
    %c0_i32_0 = arith.constant 0 : i32
    %c0_i32_1 = arith.constant 0 : i32
    return %c0_i32, %c0_i32_0 : i32, i32
  }
  func.func @transform_4(%arg0: i32) -> (i32, i32) {
    %c0_i32 = arith.constant 0 : i32
    %c0_i32_0 = arith.constant 0 : i32
    %c0_i32_1 = arith.constant 0 : i32
    return %c0_i32, %c0_i32_0 : i32, i32
  }
  func.func @transform_5(%arg0: i32) -> (i32, i32) {
    %c0_i32 = arith.constant 0 : i32
    %c0_i32_0 = arith.constant 0 : i32
    %c0_i32_1 = arith.constant 0 : i32
    return %c0_i32, %c0_i32_0 : i32, i32
  }
  func.func @transform_6(%arg0: i32) -> (i32, i32) {
    %c0_i32 = arith.constant 0 : i32
    %c0_i32_0 = arith.constant 0 : i32
    %c0_i32_1 = arith.constant 0 : i32
    return %c0_i32, %c0_i32_0 : i32, i32
  }
}

</mosaic_0001>

<llo_original>
// kernel: tpu_custom_call.1
$region0: #{tpu_custom_call.1}
  #allocation0 [shape = 'u32[]', space=smem, size = 0x4, offset = 0x4, fixed_abs, tag = 'smem constant byte address 0x4 - core index']
  #allocation1 [shape = 'u32[72,128]{1,0:T(1,128)}', space=vmem, size = 0x9000, scoped, tag = 'internal scratch']
  #allocation2 [shape = 'f32[64,512]{1,0:T(8,128)}', space=vmem, size = 0x20000, scoped, tag = 'scratch operand']
  %s0 = inlined_call_operand.hbm [shape: f32[64,200], index: 0, kind: input, shape index: {}]
  %s1 = inlined_call_operand.hbm [shape: f32[200,512], index: 1, kind: input, shape index: {}]
  %s2 = inlined_call_operand.hbm [shape: f32[128,512], index: 2, kind: input, shape index: {}]
  %s3 = inlined_call_operand.hbm [shape: f32[1,512], index: 3, kind: input, shape index: {}]
  %s4 = inlined_call_operand.hbm [shape: f32[8,128], index: 4, kind: input, shape index: {}]
  %s5 = inlined_call_operand.hbm [shape: f32[8,128], index: 5, kind: input, shape index: {}]
  %s6 = inlined_call_operand.hbm [shape: f32[64,128], index: 6, kind: output, shape index: {}]
  %s7 = sld [smem:[#allocation0]]
  $region58: #{tpu_custom_call.1} parent=0
    _
  %s9 = ssub.s32 1, %s7
  %s10 = scalar_select 0, %s9, %s7
  $region1: #{tpu_custom_call.1} parent=0
    #allocation3 [shape = 'u8[65536]{0}', space=vmem, size = 0x10000, scoped, tag = 'input window, operand 0, single buffered']
    #allocation4 [shape = 's32[1]{0}', space=sflag, size = 0x4, scoped, tag = 'scoped memory for tpu_custom_call.1']
    #allocation5 [shape = 's32[1]{0}', space=sflag, size = 0x4, scoped, tag = 'scoped memory for tpu_custom_call.1']
    #allocation6 [shape = 'u8[409600]{0}', space=vmem, size = 0x64000, scoped, tag = 'input window, operand 1, single buffered']
    #allocation7 [shape = 's32[1]{0}', space=sflag, size = 0x4, scoped, tag = 'scoped memory for tpu_custom_call.1']
    #allocation8 [shape = 'u8[262144]{0}', space=vmem, size = 0x40000, scoped, tag = 'input window, operand 2, single buffered']
    #allocation9 [shape = 'u8[2048]{0}', space=vmem, size = 0x800, scoped, tag = 'input window, operand 3, single buffered']
    #allocation10 [shape = 's32[1]{0}', space=sflag, size = 0x4, scoped, tag = 'scoped memory for tpu_custom_call.1']
    #allocation11 [shape = 'u8[4096]{0}', space=vmem, size = 0x1000, scoped, tag = 'input window, operand 4, single buffered']
    #allocation12 [shape = 'u8[4096]{0}', space=vmem, size = 0x1000, scoped, tag = 'input window, operand 5, single buffered']
    #allocation13 [shape = 's32[1]{0}', space=sflag, size = 0x4, scoped, tag = 'scoped memory for tpu_custom_call.1']
    #allocation14 [shape = 'u8[32768]{0}', space=vmem, size = 0x8000, scoped, tag = 'output window, operand 0, single buffered']
    %11 = vsyncpa [#allocation4], 0
    %12 = vsyncpa [#allocation7], 0
    %13 = vsyncpa [#allocation10], 0
    %14 = vsyncpa [#allocation13], 0
    %15 = vsyncpa [#allocation5], 0
    // Predicated region
    $region2: #{tpu_custom_call.1} parent=1 // pred_check
      _
    $region3: #{tpu_custom_call.1} parent=1 // pred_check_branch
      %17 = sbr.rel (0) target = $region5
    $region4: #{tpu_custom_call.1} parent=1 // pred_region
      %19 = vsyncadd [#allocation4], 0
      %s20 = sshll.u32 %s0, 4
      %s21 = int_to_ptr.hbm [resolvable:$true] %s20
      %s22 = sshll.u32 [#allocation3], 4
      %s23 = int_to_ptr.vmem [resolvable:$true] %s22
      %28 = dma.hbm_to_vmem [thread:$0]  %s21, 2048, %s23, [#allocation4], 256, 256, 16
    $region5: #{tpu_custom_call.1} parent=1 // pred_fallthru
      _
    // Predicated region
    $region6: #{tpu_custom_call.1} parent=1 // pred_check
      _
    $region7: #{tpu_custom_call.1} parent=1 // pred_check_branch
      %30 = sbr.rel (0) target = $region9
    $region8: #{tpu_custom_call.1} parent=1 // pred_region
      %32 = vsyncadd [#allocation7], 0
      %s33 = sshll.u32 %s1, 4
      %s34 = int_to_ptr.hbm [resolvable:$true] %s33
      %s35 = sshll.u32 [#allocation6], 4
      %s36 = int_to_ptr.vmem [resolvable:$true] %s35
      %41 = dma.hbm_to_vmem [thread:$0]  %s34, 12800, %s36, [#allocation7], 512, 512, 32
    $region9: #{tpu_custom_call.1} parent=1 // pred_fallthru
      _
    // Predicated region
    $region10: #{tpu_custom_call.1} parent=1 // pred_check
      _
    $region11: #{tpu_custom_call.1} parent=1 // pred_check_branch
      %43 = sbr.rel (0) target = $region13
    $region12: #{tpu_custom_call.1} parent=1 // pred_region
      %45 = vsyncadd [#allocation7], 0
      %s46 = sshll.u32 %s2, 4
      %s47 = int_to_ptr.hbm [resolvable:$true] %s46
      %s48 = sshll.u32 [#allocation8], 4
      %s49 = int_to_ptr.vmem [resolvable:$true] %s48
      %54 = dma.hbm_to_vmem [thread:$0]  %s47, 8192, %s49, [#allocation7], 512, 512, 32
    $region13: #{tpu_custom_call.1} parent=1 // pred_fallthru
      _
    // Predicated region
    $region14: #{tpu_custom_call.1} parent=1 // pred_check
      _
    $region15: #{tpu_custom_call.1} parent=1 // pred_check_branch
      %56 = sbr.rel (0) target = $region17
    $region16: #{tpu_custom_call.1} parent=1 // pred_region
      %58 = vsyncadd [#allocation10], 0
      %s60 = sshll.u32 %s3, 4
      %s61 = int_to_ptr.hbm [resolvable:$true] %s60
      %s62 = sshll.u32 [#allocation9], 4
      %s63 = int_to_ptr.vmem [resolvable:$true] %s62
      %65 = dma.hbm_to_vmem [thread:$0]  %s61, 64, %s63, [#allocation10]
    $region17: #{tpu_custom_call.1} parent=1 // pred_fallthru
      _
    // Predicated region
    $region18: #{tpu_custom_call.1} parent=1 // pred_check
      _
    $region19: #{tpu_custom_call.1} parent=1 // pred_check_branch
      %67 = sbr.rel (0) target = $region21
    $region20: #{tpu_custom_call.1} parent=1 // pred_region
      %69 = vsyncadd [#allocation10], 0
      %s71 = sshll.u32 %s4, 4
      %s72 = int_to_ptr.hbm [resolvable:$true] %s71
      %s73 = sshll.u32 [#allocation11], 4
      %s74 = int_to_ptr.vmem [resolvable:$true] %s73
      %76 = dma.hbm_to_vmem [thread:$0]  %s72, 128, %s74, [#allocation10]
    $region21: #{tpu_custom_call.1} parent=1 // pred_fallthru
      _
    // Predicated region
    $region22: #{tpu_custom_call.1} parent=1 // pred_check
      _
    $region23: #{tpu_custom_call.1} parent=1 // pred_check_branch
      %78 = sbr.rel (0) target = $region25
    $region24: #{tpu_custom_call.1} parent=1 // pred_region
      %80 = vsyncadd [#allocation13], 0
      %s82 = sshll.u32 %s5, 4
      %s83 = int_to_ptr.hbm [resolvable:$true] %s82
      %s84 = sshll.u32 [#allocation12], 4
      %s85 = int_to_ptr.vmem [resolvable:$true] %s84
      %87 = dma.hbm_to_vmem [thread:$0]  %s83, 128, %s85, [#allocation13]
    $region25: #{tpu_custom_call.1} parent=1 // pred_fallthru
      _
    // Predicated region
    $region26: #{tpu_custom_call.1} parent=1 // pred_check
      _
    $region27: #{tpu_custom_call.1} parent=1 // pred_check_branch
      %89 = sbr.rel (0) target = $region29
    $region28: #{tpu_custom_call.1} parent=1 // pred_region
      %91 = dma.done [#allocation4], 2048
    $region29: #{tpu_custom_call.1} parent=1 // pred_fallthru
      _
    // Predicated region
    $region30: #{tpu_custom_call.1} parent=1 // pred_check
      _
    $region31: #{tpu_custom_call.1} parent=1 // pred_check_branch
      %93 = sbr.rel (0) target = $region33
    $region32: #{tpu_custom_call.1} parent=1 // pred_region
      %95 = dma.done [#allocation7], 12800
    $region33: #{tpu_custom_call.1} parent=1 // pred_fallthru
      _
    // Predicated region
    $region34: #{tpu_custom_call.1} parent=1 // pred_check
      _
    $region35: #{tpu_custom_call.1} parent=1 // pred_check_branch
      %97 = sbr.rel (0) target = $region37
    $region36: #{tpu_custom_call.1} parent=1 // pred_region
      %99 = dma.done [#allocation7], 8192
    $region37: #{tpu_custom_call.1} parent=1 // pred_fallthru
      _
    // Predicated region
    $region38: #{tpu_custom_call.1} parent=1 // pred_check
      _
    $region39: #{tpu_custom_call.1} parent=1 // pred_check_branch
      %101 = sbr.rel (0) target = $region41
    $region40: #{tpu_custom_call.1} parent=1 // pred_region
      %103 = dma.done [#allocation10], 64
    $region41: #{tpu_custom_call.1} parent=1 // pred_fallthru
      _
    // Predicated region
    $region42: #{tpu_custom_call.1} parent=1 // pred_check
      _
    $region43: #{tpu_custom_call.1} parent=1 // pred_check_branch
      %105 = sbr.rel (0) target = $region45
    $region44: #{tpu_custom_call.1} parent=1 // pred_region
      %107 = dma.done [#allocation10], 128
    $region45: #{tpu_custom_call.1} parent=1 // pred_fallthru
      _
    // Predicated region
    $region46: #{tpu_custom_call.1} parent=1 // pred_check
      _
    $region47: #{tpu_custom_call.1} parent=1 // pred_check_branch
      %109 = sbr.rel (0) target = $region49
    $region48: #{tpu_custom_call.1} parent=1 // pred_region
      %111 = dma.done [#allocation13], 128
    $region49: #{tpu_custom_call.1} parent=1 // pred_fallthru
      _
    %v112 = vld [vmem:[#allocation3] sm:$0xff]
    %v113 = vld [vmem:[#allocation3 + $0x8] sm:$0xff]
    %v114 = vld [vmem:[#allocation3 + $0x10] sm:$0xff]
    %v115 = vld [vmem:[#allocation3 + $0x18] sm:$0xff]
    %v116 = vld [vmem:[#allocation3 + $0x20] sm:$0xff]
    %v117 = vld [vmem:[#allocation3 + $0x28] sm:$0xff]
    %v118 = vld [vmem:[#allocation3 + $0x30] sm:$0xff]
    %v119 = vld [vmem:[#allocation3 + $0x38] sm:$0xff]
    %v120 = vld [vmem:[#allocation3 + $0x40] sm:$0xff]
    %v121 = vld [vmem:[#allocation3 + $0x48] sm:$0xff]
    %v122 = vld [vmem:[#allocation3 + $0x50] sm:$0xff]
    %v123 = vld [vmem:[#allocation3 + $0x58] sm:$0xff]
    %v124 = vld [vmem:[#allocation3 + $0x60] sm:$0xff]
    %v125 = vld [vmem:[#allocation3 + $0x68] sm:$0xff]
    %v126 = vld [vmem:[#allocation3 + $0x70] sm:$0xff]
    %v127 = vld [vmem:[#allocation3 + $0x78] sm:$0xff]
    %v128 = vld [vmem:[#allocation6] sm:$0xff]
    %v129 = vld [vmem:[#allocation6 + $0x8] sm:$0xff]
    %v130 = vld [vmem:[#allocation6 + $0x10] sm:$0xff]
    %v131 = vld [vmem:[#allocation6 + $0x18] sm:$0xff]
    %v132 = vld [vmem:[#allocation6 + $0x20] sm:$0xff]
    %v133 = vld [vmem:[#allocation6 + $0x28] sm:$0xff]
    %v134 = vld [vmem:[#allocation6 + $0x30] sm:$0xff]
    %v135 = vld [vmem:[#allocation6 + $0x38] sm:$0xff]
    %v136 = vld [vmem:[#allocation6 + $0x40] sm:$0xff]
    %v137 = vld [vmem:[#allocation6 + $0x48] sm:$0xff]
    %v138 = vld [vmem:[#allocation6 + $0x50] sm:$0xff]
    %v139 = vld [vmem:[#allocation6 + $0x58] sm:$0xff]
    %v140 = vld [vmem:[#allocation6 + $0x60] sm:$0xff]
    %v141 = vld [vmem:[#allocation6 + $0x68] sm:$0xff]
    %v142 = vld [vmem:[#allocation6 + $0x70] sm:$0xff]
    %v143 = vld [vmem:[#allocation6 + $0x78] sm:$0xff]
    %v144 = vld [vmem:[#allocation6 + $0x80] sm:$0xff]
    %v145 = vld [vmem:[#allocation6 + $0x88] sm:$0xff]
    %v146 = vld [vmem:[#allocation6 + $0x90] sm:$0xff]
    %v147 = vld [vmem:[#allocation6 + $0x98] sm:$0xff]
    %v148 = vld [vmem:[#allocation6 + $0xa0] sm:$0xff]
    %v149 = vld [vmem:[#allocation6 + $0xa8] sm:$0xff]
    %v150 = vld [vmem:[#allocation6 + $0xb0] sm:$0xff]
    %v151 = vld [vmem:[#allocation6 + $0xb8] sm:$0xff]
    %v152 = vld [vmem:[#allocation6 + $0xc0] sm:$0xff]
    %v153 = vld [vmem:[#allocation6 + $0xc8] sm:$0xff]
    %v154 = vld [vmem:[#allocation6 + $0xd0] sm:$0xff]
    %v155 = vld [vmem:[#allocation6 + $0xd8] sm:$0xff]
    %v156 = vld [vmem:[#allocation6 + $0xe0] sm:$0xff]
    %v157 = vld [vmem:[#allocation6 + $0xe8] sm:$0xff]
    %v158 = vld [vmem:[#allocation6 + $0xf0] sm:$0xff]
    %v159 = vld [vmem:[#allocation6 + $0xf8] sm:$0xff]
    %v160 = vld [vmem:[#allocation6 + $0x100] sm:$0xff]
    %v161 = vld [vmem:[#allocation6 + $0x108] sm:$0xff]
    %v162 = vld [vmem:[#allocation6 + $0x110] sm:$0xff]
    %v163 = vld [vmem:[#allocation6 + $0x118] sm:$0xff]
    %v164 = vld [vmem:[#allocation6 + $0x120] sm:$0xff]
    %v165 = vld [vmem:[#allocation6 + $0x128] sm:$0xff]
    %v166 = vld [vmem:[#allocation6 + $0x130] sm:$0xff]
    %v167 = vld [vmem:[#allocation6 + $0x138] sm:$0xff]
    %v168 = vld [vmem:[#allocation6 + $0x140] sm:$0xff]
    %v169 = vld [vmem:[#allocation6 + $0x148] sm:$0xff]
    %v170 = vld [vmem:[#allocation6 + $0x150] sm:$0xff]
    %v171 = vld [vmem:[#allocation6 + $0x158] sm:$0xff]
    %v172 = vld [vmem:[#allocation6 + $0x160] sm:$0xff]
    %v173 = vld [vmem:[#allocation6 + $0x168] sm:$0xff]
    %v174 = vld [vmem:[#allocation6 + $0x170] sm:$0xff]
    %v175 = vld [vmem:[#allocation6 + $0x178] sm:$0xff]
    %v176 = vld [vmem:[#allocation6 + $0x180] sm:$0xff]
    %v177 = vld [vmem:[#allocation6 + $0x188] sm:$0xff]
    %v178 = vld [vmem:[#allocation6 + $0x190] sm:$0xff]
    %v179 = vld [vmem:[#allocation6 + $0x198] sm:$0xff]
    %v180 = vld [vmem:[#allocation6 + $0x1a0] sm:$0xff]
    %v181 = vld [vmem:[#allocation6 + $0x1a8] sm:$0xff]
    %v182 = vld [vmem:[#allocation6 + $0x1b0] sm:$0xff]
    %v183 = vld [vmem:[#allocation6 + $0x1b8] sm:$0xff]
    %v184 = vld [vmem:[#allocation6 + $0x1c0] sm:$0xff]
    %v185 = vld [vmem:[#allocation6 + $0x1c8] sm:$0xff]
    %v186 = vld [vmem:[#allocation6 + $0x1d0] sm:$0xff]
    %v187 = vld [vmem:[#allocation6 + $0x1d8] sm:$0xff]
    %v188 = vld [vmem:[#allocation6 + $0x1e0] sm:$0xff]
    %v189 = vld [vmem:[#allocation6 + $0x1e8] sm:$0xff]
    %v190 = vld [vmem:[#allocation6 + $0x1f0] sm:$0xff]
    %v191 = vld [vmem:[#allocation6 + $0x1f8] sm:$0xff]
    %v192 = vld [vmem:[#allocation6 + $0x200] sm:$0xff]
    %v193 = vld [vmem:[#allocation6 + $0x208] sm:$0xff]
    %v194 = vld [vmem:[#allocation6 + $0x210] sm:$0xff]
    %v195 = vld [vmem:[#allocation6 + $0x218] sm:$0xff]
    %v196 = vld [vmem:[#allocation6 + $0x220] sm:$0xff]
    %v197 = vld [vmem:[#allocation6 + $0x228] sm:$0xff]
    %v198 = vld [vmem:[#allocation6 + $0x230] sm:$0xff]
    %v199 = vld [vmem:[#allocation6 + $0x238] sm:$0xff]
    %v200 = vld [vmem:[#allocation6 + $0x240] sm:$0xff]
    %v201 = vld [vmem:[#allocation6 + $0x248] sm:$0xff]
    %v202 = vld [vmem:[#allocation6 + $0x250] sm:$0xff]
    %v203 = vld [vmem:[#allocation6 + $0x258] sm:$0xff]
    %v204 = vld [vmem:[#allocation6 + $0x260] sm:$0xff]
    %v205 = vld [vmem:[#allocation6 + $0x268] sm:$0xff]
    %v206 = vld [vmem:[#allocation6 + $0x270] sm:$0xff]
    %v207 = vld [vmem:[#allocation6 + $0x278] sm:$0xff]
    %v208 = vld [vmem:[#allocation6 + $0x280] sm:$0xff]
    %v209 = vld [vmem:[#allocation6 + $0x288] sm:$0xff]
    %v210 = vld [vmem:[#allocation6 + $0x290] sm:$0xff]
    %v211 = vld [vmem:[#allocation6 + $0x298] sm:$0xff]
    %v212 = vld [vmem:[#allocation6 + $0x2a0] sm:$0xff]
    %v213 = vld [vmem:[#allocation6 + $0x2a8] sm:$0xff]
    %v214 = vld [vmem:[#allocation6 + $0x2b0] sm:$0xff]
    %v215 = vld [vmem:[#allocation6 + $0x2b8] sm:$0xff]
    %v216 = vld [vmem:[#allocation6 + $0x2c0] sm:$0xff]
    %v217 = vld [vmem:[#allocation6 + $0x2c8] sm:$0xff]
    %v218 = vld [vmem:[#allocation6 + $0x2d0] sm:$0xff]
    %v219 = vld [vmem:[#allocation6 + $0x2d8] sm:$0xff]
    %v220 = vld [vmem:[#allocation6 + $0x2e0] sm:$0xff]
    %v221 = vld [vmem:[#allocation6 + $0x2e8] sm:$0xff]
    %v222 = vld [vmem:[#allocation6 + $0x2f0] sm:$0xff]
    %v223 = vld [vmem:[#allocation6 + $0x2f8] sm:$0xff]
    %v224 = vld [vmem:[#allocation6 + $0x300] sm:$0xff]
    %v225 = vld [vmem:[#allocation6 + $0x308] sm:$0xff]
    %v226 = vld [vmem:[#allocation6 + $0x310] sm:$0xff]
    %v227 = vld [vmem:[#allocation6 + $0x318] sm:$0xff]
    %v228 = vld [vmem:[#allocation9] sm:$0xf]
    %v230 = vperm.slane %v228, 0
    %v231 = vperm.slane %v228, 1
    %v232 = vperm.slane %v228, 2
    %v233 = vperm.slane %v228, 3
    %vm238 = vcmask 588800
    %v240 = vsel %vm238, %v113, 0
    %v243 = vsel %vm238, %v115, 0
    %v246 = vsel %vm238, %v117, 0
    %v249 = vsel %vm238, %v119, 0
    %v252 = vsel %vm238, %v121, 0
    %v255 = vsel %vm238, %v123, 0
    %v258 = vsel %vm238, %v125, 0
    %v261 = vsel %vm238, %v127, 0
    %263 = vmatpush.msra.mxu0 %v188
    %264 = vmatpush.msra.mxu0 %v184
    %265 = vmatpush.msra.mxu0 %v180
    %266 = vmatpush.msra.mxu0 %v176
    %267 = vmatpush.msra.mxu0 %v172
    %268 = vmatpush.msra.mxu0 %v168
    %269 = vmatpush.msra.mxu0 %v164
    %270 = vmatpush.msra.mxu0 %v160
    %271 = vmatpush.msra.mxu0 %v156
    %272 = vmatpush.msra.mxu0 %v152
    %273 = vmatpush.msra.mxu0 %v148
    %274 = vmatpush.msra.mxu0 %v144
    %275 = vmatpush.msra.mxu0 %v140
    %276 = vmatpush.msra.mxu0 %v136
    %277 = vmatpush.msra.mxu0 %v132
    %278 = vmatpush.msra.mxu0 %v128
    %279 = vmatmul.f32.gmra.mxu0 %v112
    %v280 = vpop.f32.mrf.mxu0
    %v281 = vadd.f32 %v230, %v280
    %282 = vmatmul.f32.gmra.mxu0 %v114
    %v283 = vpop.f32.mrf.mxu0
    %v284 = vadd.f32 %v230, %v283
    %285 = vmatmul.f32.gmra.mxu0 %v116
    %v286 = vpop.f32.mrf.mxu0
    %v287 = vadd.f32 %v230, %v286
    %288 = vmatmul.f32.gmra.mxu0 %v118
    %v289 = vpop.f32.mrf.mxu0
    %v290 = vadd.f32 %v230, %v289
    %291 = vmatmul.f32.gmra.mxu0 %v120
    %v292 = vpop.f32.mrf.mxu0
    %v293 = vadd.f32 %v230, %v292
    %294 = vmatmul.f32.gmra.mxu0 %v122
    %v295 = vpop.f32.mrf.mxu0
    %v296 = vadd.f32 %v230, %v295
    %297 = vmatmul.f32.gmra.mxu0 %v124
    %v298 = vpop.f32.mrf.mxu0
    %v299 = vadd.f32 %v230, %v298
    %300 = vmatmul.f32.gmra.mxu0 %v126
    %v301 = vpop.f32.mrf.mxu0
    %v302 = vadd.f32 %v230, %v301
    %303 = vdwg.mxu0
    %304 = vmatpush.msra.mxu0 0.0
    %305 = vmatpush.msra.mxu0 0.0
    %306 = vmatpush.msra.mxu0 0.0
    %307 = vmatpush.msra.mxu0 0.0
    %308 = vmatpush.msra.mxu0 0.0
    %309 = vmatpush.msra.mxu0 0.0
    %310 = vmatpush.msra.mxu0 0.0
    %311 = vmatpush.msra.mxu0 %v224
    %312 = vmatpush.msra.mxu0 %v220
    %313 = vmatpush.msra.mxu0 %v216
    %314 = vmatpush.msra.mxu0 %v212
    %315 = vmatpush.msra.mxu0 %v208
    %316 = vmatpush.msra.mxu0 %v204
    %317 = vmatpush.msra.mxu0 %v200
    %318 = vmatpush.msra.mxu0 %v196
    %319 = vmatpush.msra.mxu0 %v192
    %320 = vmatmul.f32.gmra.mxu0 %v240
    %v321 = vpop.f32.mrf.mxu0
    %v322 = vadd.f32 %v281, %v321
    %323 = vmatmul.f32.gmra.mxu0 %v243
    %v324 = vpop.f32.mrf.mxu0
    %v325 = vadd.f32 %v284, %v324
    %326 = vmatmul.f32.gmra.mxu0 %v246
    %v327 = vpop.f32.mrf.mxu0
    %v328 = vadd.f32 %v287, %v327
    %329 = vmatmul.f32.gmra.mxu0 %v249
    %v330 = vpop.f32.mrf.mxu0
    %v331 = vadd.f32 %v290, %v330
    %332 = vmatmul.f32.gmra.mxu0 %v252
    %v333 = vpop.f32.mrf.mxu0
    %v334 = vadd.f32 %v293, %v333
    %335 = vmatmul.f32.gmra.mxu0 %v255
    %v336 = vpop.f32.mrf.mxu0
    %v337 = vadd.f32 %v296, %v336
    %338 = vmatmul.f32.gmra.mxu0 %v258
    %v339 = vpop.f32.mrf.mxu0
    %v340 = vadd.f32 %v299, %v339
    %341 = vmatmul.f32.gmra.mxu0 %v261
    %v342 = vpop.f32.mrf.mxu0
    %v343 = vadd.f32 %v302, %v342
    %344 = vdwg.mxu0
    %345 = vmatpush.msra.mxu0 %v189
    %346 = vmatpush.msra.mxu0 %v185
    %347 = vmatpush.msra.mxu0 %v181
    %348 = vmatpush.msra.mxu0 %v177
    %349 = vmatpush.msra.mxu0 %v173
    %350 = vmatpush.msra.mxu0 %v169
    %351 = vmatpush.msra.mxu0 %v165
    %352 = vmatpush.msra.mxu0 %v161
    %353 = vmatpush.msra.mxu0 %v157
    %354 = vmatpush.msra.mxu0 %v153
    %355 = vmatpush.msra.mxu0 %v149
    %356 = vmatpush.msra.mxu0 %v145
    %357 = vmatpush.msra.mxu0 %v141
    %358 = vmatpush.msra.mxu0 %v137
    %359 = vmatpush.msra.mxu0 %v133
    %360 = vmatpush.msra.mxu0 %v129
    %361 = vmatmul.f32.gmra.mxu0 %v112
    %v362 = vpop.f32.mrf.mxu0
    %v363 = vadd.f32 %v231, %v362
    %364 = vmatmul.f32.gmra.mxu0 %v114
    %v365 = vpop.f32.mrf.mxu0
    %v366 = vadd.f32 %v231, %v365
    %367 = vmatmul.f32.gmra.mxu0 %v116
    %v368 = vpop.f32.mrf.mxu0
    %v369 = vadd.f32 %v231, %v368
    %370 = vmatmul.f32.gmra.mxu0 %v118
    %v371 = vpop.f32.mrf.mxu0
    %v372 = vadd.f32 %v231, %v371
    %373 = vmatmul.f32.gmra.mxu0 %v120
    %v374 = vpop.f32.mrf.mxu0
    %v375 = vadd.f32 %v231, %v374
    %376 = vmatmul.f32.gmra.mxu0 %v122
    %v377 = vpop.f32.mrf.mxu0
    %v378 = vadd.f32 %v231, %v377
    %379 = vmatmul.f32.gmra.mxu0 %v124
    %v380 = vpop.f32.mrf.mxu0
    %v381 = vadd.f32 %v231, %v380
    %382 = vmatmul.f32.gmra.mxu0 %v126
    %v383 = vpop.f32.mrf.mxu0
    %v384 = vadd.f32 %v231, %v383
    %385 = vdwg.mxu0
    %386 = vmatpush.msra.mxu0 0.0
    %387 = vmatpush.msra.mxu0 0.0
    %388 = vmatpush.msra.mxu0 0.0
    %389 = vmatpush.msra.mxu0 0.0
    %390 = vmatpush.msra.mxu0 0.0
    %391 = vmatpush.msra.mxu0 0.0
    %392 = vmatpush.msra.mxu0 0.0
    %393 = vmatpush.msra.mxu0 %v225
    %394 = vmatpush.msra.mxu0 %v221
    %395 = vmatpush.msra.mxu0 %v217
    %396 = vmatpush.msra.mxu0 %v213
    %397 = vmatpush.msra.mxu0 %v209
    %398 = vmatpush.msra.mxu0 %v205
    %399 = vmatpush.msra.mxu0 %v201
    %400 = vmatpush.msra.mxu0 %v197
    %401 = vmatpush.msra.mxu0 %v193
    %402 = vmatmul.f32.gmra.mxu0 %v240
    %v403 = vpop.f32.mrf.mxu0
    %v404 = vadd.f32 %v363, %v403
    %405 = vmatmul.f32.gmra.mxu0 %v243
    %v406 = vpop.f32.mrf.mxu0
    %v407 = vadd.f32 %v366, %v406
    %408 = vmatmul.f32.gmra.mxu0 %v246
    %v409 = vpop.f32.mrf.mxu0
    %v410 = vadd.f32 %v369, %v409
    %411 = vmatmul.f32.gmra.mxu0 %v249
    %v412 = vpop.f32.mrf.mxu0
    %v413 = vadd.f32 %v372, %v412
    %414 = vmatmul.f32.gmra.mxu0 %v252
    %v415 = vpop.f32.mrf.mxu0
    %v416 = vadd.f32 %v375, %v415
    %417 = vmatmul.f32.gmra.mxu0 %v255
    %v418 = vpop.f32.mrf.mxu0
    %v419 = vadd.f32 %v378, %v418
    %420 = vmatmul.f32.gmra.mxu0 %v258
    %v421 = vpop.f32.mrf.mxu0
    %v422 = vadd.f32 %v381, %v421
    %423 = vmatmul.f32.gmra.mxu0 %v261
    %v424 = vpop.f32.mrf.mxu0
    %v425 = vadd.f32 %v384, %v424
    %426 = vdwg.mxu0
    %427 = vmatpush.msra.mxu0 %v190
    %428 = vmatpush.msra.mxu0 %v186
    %429 = vmatpush.msra.mxu0 %v182
    %430 = vmatpush.msra.mxu0 %v178
    %431 = vmatpush.msra.mxu0 %v174
    %432 = vmatpush.msra.mxu0 %v170
    %433 = vmatpush.msra.mxu0 %v166
    %434 = vmatpush.msra.mxu0 %v162
    %435 = vmatpush.msra.mxu0 %v158
    %436 = vmatpush.msra.mxu0 %v154
    %437 = vmatpush.msra.mxu0 %v150
    %438 = vmatpush.msra.mxu0 %v146
    %439 = vmatpush.msra.mxu0 %v142
    %440 = vmatpush.msra.mxu0 %v138
    %441 = vmatpush.msra.mxu0 %v134
    %442 = vmatpush.msra.mxu0 %v130
    %443 = vmatmul.f32.gmra.mxu0 %v112
    %v444 = vpop.f32.mrf.mxu0
    %v445 = vadd.f32 %v232, %v444
    %446 = vmatmul.f32.gmra.mxu0 %v114
    %v447 = vpop.f32.mrf.mxu0
    %v448 = vadd.f32 %v232, %v447
    %449 = vmatmul.f32.gmra.mxu0 %v116
    %v450 = vpop.f32.mrf.mxu0
    %v451 = vadd.f32 %v232, %v450
    %452 = vmatmul.f32.gmra.mxu0 %v118
    %v453 = vpop.f32.mrf.mxu0
    %v454 = vadd.f32 %v232, %v453
    %455 = vmatmul.f32.gmra.mxu0 %v120
    %v456 = vpop.f32.mrf.mxu0
    %v457 = vadd.f32 %v232, %v456
    %458 = vmatmul.f32.gmra.mxu0 %v122
    %v459 = vpop.f32.mrf.mxu0
    %v460 = vadd.f32 %v232, %v459
    %461 = vmatmul.f32.gmra.mxu0 %v124
    %v462 = vpop.f32.mrf.mxu0
    %v463 = vadd.f32 %v232, %v462
    %464 = vmatmul.f32.gmra.mxu0 %v126
    %v465 = vpop.f32.mrf.mxu0
    %v466 = vadd.f32 %v232, %v465
    %467 = vdwg.mxu0
    %468 = vmatpush.msra.mxu0 0.0
    %469 = vmatpush.msra.mxu0 0.0
    %470 = vmatpush.msra.mxu0 0.0
    %471 = vmatpush.msra.mxu0 0.0
    %472 = vmatpush.msra.mxu0 0.0
    %473 = vmatpush.msra.mxu0 0.0
    %474 = vmatpush.msra.mxu0 0.0
    %475 = vmatpush.msra.mxu0 %v226
    %476 = vmatpush.msra.mxu0 %v222
    %477 = vmatpush.msra.mxu0 %v218
    %478 = vmatpush.msra.mxu0 %v214
    %479 = vmatpush.msra.mxu0 %v210
    %480 = vmatpush.msra.mxu0 %v206
    %481 = vmatpush.msra.mxu0 %v202
    %482 = vmatpush.msra.mxu0 %v198
    %483 = vmatpush.msra.mxu0 %v194
    %484 = vmatmul.f32.gmra.mxu0 %v240
    %v485 = vpop.f32.mrf.mxu0
    %v486 = vadd.f32 %v445, %v485
    %487 = vmatmul.f32.gmra.mxu0 %v243
    %v488 = vpop.f32.mrf.mxu0
    %v489 = vadd.f32 %v448, %v488
    %490 = vmatmul.f32.gmra.mxu0 %v246
    %v491 = vpop.f32.mrf.mxu0
    %v492 = vadd.f32 %v451, %v491
    %493 = vmatmul.f32.gmra.mxu0 %v249
    %v494 = vpop.f32.mrf.mxu0
    %v495 = vadd.f32 %v454, %v494
    %496 = vmatmul.f32.gmra.mxu0 %v252
    %v497 = vpop.f32.mrf.mxu0
    %v498 = vadd.f32 %v457, %v497
    %499 = vmatmul.f32.gmra.mxu0 %v255
    %v500 = vpop.f32.mrf.mxu0
    %v501 = vadd.f32 %v460, %v500
    %502 = vmatmul.f32.gmra.mxu0 %v258
    %v503 = vpop.f32.mrf.mxu0
    %v504 = vadd.f32 %v463, %v503
    %505 = vmatmul.f32.gmra.mxu0 %v261
    %v506 = vpop.f32.mrf.mxu0
    %v507 = vadd.f32 %v466, %v506
    %508 = vdwg.mxu0
    %509 = vmatpush.msra.mxu0 %v191
    %510 = vmatpush.msra.mxu0 %v187
    %511 = vmatpush.msra.mxu0 %v183
    %512 = vmatpush.msra.mxu0 %v179
    %513 = vmatpush.msra.mxu0 %v175
    %514 = vmatpush.msra.mxu0 %v171
    %515 = vmatpush.msra.mxu0 %v167
    %516 = vmatpush.msra.mxu0 %v163
    %517 = vmatpush.msra.mxu0 %v159
    %518 = vmatpush.msra.mxu0 %v155
    %519 = vmatpush.msra.mxu0 %v151
    %520 = vmatpush.msra.mxu0 %v147
    %521 = vmatpush.msra.mxu0 %v143
    %522 = vmatpush.msra.mxu0 %v139
    %523 = vmatpush.msra.mxu0 %v135
    %524 = vmatpush.msra.mxu0 %v131
    %525 = vmatmul.f32.gmra.mxu0 %v112
    %v526 = vpop.f32.mrf.mxu0
    %v527 = vadd.f32 %v233, %v526
    %528 = vmatmul.f32.gmra.mxu0 %v114
    %v529 = vpop.f32.mrf.mxu0
    %v530 = vadd.f32 %v233, %v529
    %531 = vmatmul.f32.gmra.mxu0 %v116
    %v532 = vpop.f32.mrf.mxu0
    %v533 = vadd.f32 %v233, %v532
    %534 = vmatmul.f32.gmra.mxu0 %v118
    %v535 = vpop.f32.mrf.mxu0
    %v536 = vadd.f32 %v233, %v535
    %537 = vmatmul.f32.gmra.mxu0 %v120
    %v538 = vpop.f32.mrf.mxu0
    %v539 = vadd.f32 %v233, %v538
    %540 = vmatmul.f32.gmra.mxu0 %v122
    %v541 = vpop.f32.mrf.mxu0
    %v542 = vadd.f32 %v233, %v541
    %543 = vmatmul.f32.gmra.mxu0 %v124
    %v544 = vpop.f32.mrf.mxu0
    %v545 = vadd.f32 %v233, %v544
    %546 = vmatmul.f32.gmra.mxu0 %v126
    %v547 = vpop.f32.mrf.mxu0
    %v548 = vadd.f32 %v233, %v547
    %549 = vdwg.mxu0
    %550 = vmatpush.msra.mxu0 0.0
    %551 = vmatpush.msra.mxu0 0.0
    %552 = vmatpush.msra.mxu0 0.0
    %553 = vmatpush.msra.mxu0 0.0
    %554 = vmatpush.msra.mxu0 0.0
    %555 = vmatpush.msra.mxu0 0.0
    %556 = vmatpush.msra.mxu0 0.0
    %557 = vmatpush.msra.mxu0 %v227
    %558 = vmatpush.msra.mxu0 %v223
    %559 = vmatpush.msra.mxu0 %v219
    %560 = vmatpush.msra.mxu0 %v215
    %561 = vmatpush.msra.mxu0 %v211
    %562 = vmatpush.msra.mxu0 %v207
    %563 = vmatpush.msra.mxu0 %v203
    %564 = vmatpush.msra.mxu0 %v199
    %565 = vmatpush.msra.mxu0 %v195
    %566 = vmatmul.f32.gmra.mxu0 %v240
    %v567 = vpop.f32.mrf.mxu0
    %v568 = vadd.f32 %v527, %v567
    %569 = vmatmul.f32.gmra.mxu0 %v243
    %v570 = vpop.f32.mrf.mxu0
    %v571 = vadd.f32 %v530, %v570
    %572 = vmatmul.f32.gmra.mxu0 %v246
    %v573 = vpop.f32.mrf.mxu0
    %v574 = vadd.f32 %v533, %v573
    %575 = vmatmul.f32.gmra.mxu0 %v249
    %v576 = vpop.f32.mrf.mxu0
    %v577 = vadd.f32 %v536, %v576
    %578 = vmatmul.f32.gmra.mxu0 %v252
    %v579 = vpop.f32.mrf.mxu0
    %v580 = vadd.f32 %v539, %v579
    %581 = vmatmul.f32.gmra.mxu0 %v255
    %v582 = vpop.f32.mrf.mxu0
    %v583 = vadd.f32 %v542, %v582
    %584 = vmatmul.f32.gmra.mxu0 %v258
    %v585 = vpop.f32.mrf.mxu0
    %v586 = vadd.f32 %v545, %v585
    %587 = vmatmul.f32.gmra.mxu0 %v261
    %v588 = vpop.f32.mrf.mxu0
    %v589 = vadd.f32 %v548, %v588
    %590 = vdwg.mxu0
    %591 = vst [vmem:[#allocation2] sm:$0xff] %v322
    %592 = vst [vmem:[#allocation2 + $0x8] sm:$0xff] %v404
    %593 = vst [vmem:[#allocation2 + $0x10] sm:$0xff] %v486
    %594 = vst [vmem:[#allocation2 + $0x18] sm:$0xff] %v568
    %595 = vst [vmem:[#allocation2 + $0x20] sm:$0xff] %v325
    %596 = vst [vmem:[#allocation2 + $0x28] sm:$0xff] %v407
    %597 = vst [vmem:[#allocation2 + $0x30] sm:$0xff] %v489
    %598 = vst [vmem:[#allocation2 + $0x38] sm:$0xff] %v571
    %599 = vst [vmem:[#allocation2 + $0x40] sm:$0xff] %v328
    %600 = vst [vmem:[#allocation2 + $0x48] sm:$0xff] %v410
    %601 = vst [vmem:[#allocation2 + $0x50] sm:$0xff] %v492
    %602 = vst [vmem:[#allocation2 + $0x58] sm:$0xff] %v574
    %603 = vst [vmem:[#allocation2 + $0x60] sm:$0xff] %v331
    %604 = vst [vmem:[#allocation2 + $0x68] sm:$0xff] %v413
    %605 = vst [vmem:[#allocation2 + $0x70] sm:$0xff] %v495
    %606 = vst [vmem:[#allocation2 + $0x78] sm:$0xff] %v577
    %607 = vst [vmem:[#allocation2 + $0x80] sm:$0xff] %v334
    %608 = vst [vmem:[#allocation2 + $0x88] sm:$0xff] %v416
    %609 = vst [vmem:[#allocation2 + $0x90] sm:$0xff] %v498
    %610 = vst [vmem:[#allocation2 + $0x98] sm:$0xff] %v580
    %611 = vst [vmem:[#allocation2 + $0xa0] sm:$0xff] %v337
    %612 = vst [vmem:[#allocation2 + $0xa8] sm:$0xff] %v419
    %613 = vst [vmem:[#allocation2 + $0xb0] sm:$0xff] %v501
    %614 = vst [vmem:[#allocation2 + $0xb8] sm:$0xff] %v583
    %615 = vst [vmem:[#allocation2 + $0xc0] sm:$0xff] %v340
    %616 = vst [vmem:[#allocation2 + $0xc8] sm:$0xff] %v422
    %617 = vst [vmem:[#allocation2 + $0xd0] sm:$0xff] %v504
    %618 = vst [vmem:[#allocation2 + $0xd8] sm:$0xff] %v586
    %619 = vst [vmem:[#allocation2 + $0xe0] sm:$0xff] %v343
    %620 = vst [vmem:[#allocation2 + $0xe8] sm:$0xff] %v425
    %621 = vst [vmem:[#allocation2 + $0xf0] sm:$0xff] %v507
    %622 = vst [vmem:[#allocation2 + $0xf8] sm:$0xff] %v589
    %v623 = vld [vmem:[#allocation8] sm:$0xff]
    %v624 = vld [vmem:[#allocation8 + $0x8] sm:$0xff]
    %v625 = vld [vmem:[#allocation8 + $0x10] sm:$0xff]
    %v626 = vld [vmem:[#allocation8 + $0x18] sm:$0xff]
    %v627 = vld [vmem:[#allocation8 + $0x20] sm:$0xff]
    %v628 = vld [vmem:[#allocation8 + $0x28] sm:$0xff]
    %v629 = vld [vmem:[#allocation8 + $0x30] sm:$0xff]
    %v630 = vld [vmem:[#allocation8 + $0x38] sm:$0xff]
    %v631 = vld [vmem:[#allocation8 + $0x40] sm:$0xff]
    %v632 = vld [vmem:[#allocation8 + $0x48] sm:$0xff]
    %v633 = vld [vmem:[#allocation8 + $0x50] sm:$0xff]
    %v634 = vld [vmem:[#allocation8 + $0x58] sm:$0xff]
    %v635 = vld [vmem:[#allocation8 + $0x60] sm:$0xff]
    %v636 = vld [vmem:[#allocation8 + $0x68] sm:$0xff]
    %v637 = vld [vmem:[#allocation8 + $0x70] sm:$0xff]
    %v638 = vld [vmem:[#allocation8 + $0x78] sm:$0xff]
    %v639 = vld [vmem:[#allocation8 + $0x80] sm:$0xff]
    %v640 = vld [vmem:[#allocation8 + $0x88] sm:$0xff]
    %v641 = vld [vmem:[#allocation8 + $0x90] sm:$0xff]
    %v642 = vld [vmem:[#allocation8 + $0x98] sm:$0xff]
    %v643 = vld [vmem:[#allocation8 + $0xa0] sm:$0xff]
    %v644 = vld [vmem:[#allocation8 + $0xa8] sm:$0xff]
    %v645 = vld [vmem:[#allocation8 + $0xb0] sm:$0xff]
    %v646 = vld [vmem:[#allocation8 + $0xb8] sm:$0xff]
    %v647 = vld [vmem:[#allocation8 + $0xc0] sm:$0xff]
    %v648 = vld [vmem:[#allocation8 + $0xc8] sm:$0xff]
    %v649 = vld [vmem:[#allocation8 + $0xd0] sm:$0xff]
    %v650 = vld [vmem:[#allocation8 + $0xd8] sm:$0xff]
    %v651 = vld [vmem:[#allocation8 + $0xe0] sm:$0xff]
    %v652 = vld [vmem:[#allocation8 + $0xe8] sm:$0xff]
    %v653 = vld [vmem:[#allocation8 + $0xf0] sm:$0xff]
    %v654 = vld [vmem:[#allocation8 + $0xf8] sm:$0xff]
    %v655 = vld [vmem:[#allocation8 + $0x100] sm:$0xff]
    %v656 = vld [vmem:[#allocation8 + $0x108] sm:$0xff]
    %v657 = vld [vmem:[#allocation8 + $0x110] sm:$0xff]
    %v658 = vld [vmem:[#allocation8 + $0x118] sm:$0xff]
    %v659 = vld [vmem:[#allocation8 + $0x120] sm:$0xff]
    %v660 = vld [vmem:[#allocation8 + $0x128] sm:$0xff]
    %v661 = vld [vmem:[#allocation8 + $0x130] sm:$0xff]
    %v662 = vld [vmem:[#allocation8 + $0x138] sm:$0xff]
    %v663 = vld [vmem:[#allocation8 + $0x140] sm:$0xff]
    %v664 = vld [vmem:[#allocation8 + $0x148] sm:$0xff]
    %v665 = vld [vmem:[#allocation8 + $0x150] sm:$0xff]
    %v666 = vld [vmem:[#allocation8 + $0x158] sm:$0xff]
    %v667 = vld [vmem:[#allocation8 + $0x160] sm:$0xff]
    %v668 = vld [vmem:[#allocation8 + $0x168] sm:$0xff]
    %v669 = vld [vmem:[#allocation8 + $0x170] sm:$0xff]
    %v670 = vld [vmem:[#allocation8 + $0x178] sm:$0xff]
    %v671 = vld [vmem:[#allocation8 + $0x180] sm:$0xff]
    %v672 = vld [vmem:[#allocation8 + $0x188] sm:$0xff]
    %v673 = vld [vmem:[#allocation8 + $0x190] sm:$0xff]
    %v674 = vld [vmem:[#allocation8 + $0x198] sm:$0xff]
    %v675 = vld [vmem:[#allocation8 + $0x1a0] sm:$0xff]
    %v676 = vld [vmem:[#allocation8 + $0x1a8] sm:$0xff]
    %v677 = vld [vmem:[#allocation8 + $0x1b0] sm:$0xff]
    %v678 = vld [vmem:[#allocation8 + $0x1b8] sm:$0xff]
    %v679 = vld [vmem:[#allocation8 + $0x1c0] sm:$0xff]
    %v680 = vld [vmem:[#allocation8 + $0x1c8] sm:$0xff]
    %v681 = vld [vmem:[#allocation8 + $0x1d0] sm:$0xff]
    %v682 = vld [vmem:[#allocation8 + $0x1d8] sm:$0xff]
    %v683 = vld [vmem:[#allocation8 + $0x1e0] sm:$0xff]
    %v684 = vld [vmem:[#allocation8 + $0x1e8] sm:$0xff]
    %v685 = vld [vmem:[#allocation8 + $0x1f0] sm:$0xff]
    %v686 = vld [vmem:[#allocation8 + $0x1f8] sm:$0xff]
    %v687 = vld [vmem:[#allocation11] sm:$0xff]
    %v688 = vld [vmem:[#allocation12] sm:$0xff]
    %v689 = vld [vmem:[#allocation2] sm:$0xff]
    %v690 = vld [vmem:[#allocation2 + $0x8] sm:$0xff]
    %v691 = vld [vmem:[#allocation2 + $0x10] sm:$0xff]
    %v692 = vld [vmem:[#allocation2 + $0x18] sm:$0xff]
    %693 = vmatpush.msra.mxu0 %v683
    %694 = vmatpush.msra.mxu0 %v679
    %695 = vmatpush.msra.mxu0 %v675
    %696 = vmatpush.msra.mxu0 %v671
    %697 = vmatpush.msra.mxu0 %v667
    %698 = vmatpush.msra.mxu0 %v663
    %699 = vmatpush.msra.mxu0 %v659
    %700 = vmatpush.msra.mxu0 %v655
    %701 = vmatpush.msra.mxu0 %v651
    %702 = vmatpush.msra.mxu0 %v647
    %703 = vmatpush.msra.mxu0 %v643
    %704 = vmatpush.msra.mxu0 %v639
    %705 = vmatpush.msra.mxu0 %v635
    %706 = vmatpush.msra.mxu0 %v631
    %707 = vmatpush.msra.mxu0 %v627
    %708 = vmatpush.msra.mxu0 %v623
    %709 = vmatmul.f32.gmra.mxu0 %v687
    %v710 = vpop.f32.mrf.mxu0
    %v711 = vadd.f32 0.0, %v710
    %712 = vdwg.mxu0
    %713 = vmatpush.msra.mxu0 %v684
    %714 = vmatpush.msra.mxu0 %v680
    %715 = vmatpush.msra.mxu0 %v676
    %716 = vmatpush.msra.mxu0 %v672
    %717 = vmatpush.msra.mxu0 %v668
    %718 = vmatpush.msra.mxu0 %v664
    %719 = vmatpush.msra.mxu0 %v660
    %720 = vmatpush.msra.mxu0 %v656
    %721 = vmatpush.msra.mxu0 %v652
    %722 = vmatpush.msra.mxu0 %v648
    %723 = vmatpush.msra.mxu0 %v644
    %724 = vmatpush.msra.mxu0 %v640
    %725 = vmatpush.msra.mxu0 %v636
    %726 = vmatpush.msra.mxu0 %v632
    %727 = vmatpush.msra.mxu0 %v628
    %728 = vmatpush.msra.mxu0 %v624
    %729 = vmatmul.f32.gmra.mxu0 %v687
    %v730 = vpop.f32.mrf.mxu0
    %v731 = vadd.f32 0.0, %v730
    %732 = vdwg.mxu0
    %733 = vmatpush.msra.mxu0 %v685
    %734 = vmatpush.msra.mxu0 %v681
    %735 = vmatpush.msra.mxu0 %v677
    %736 = vmatpush.msra.mxu0 %v673
    %737 = vmatpush.msra.mxu0 %v669
    %738 = vmatpush.msra.mxu0 %v665
    %739 = vmatpush.msra.mxu0 %v661
    %740 = vmatpush.msra.mxu0 %v657
    %741 = vmatpush.msra.mxu0 %v653
    %742 = vmatpush.msra.mxu0 %v649
    %743 = vmatpush.msra.mxu0 %v645
    %744 = vmatpush.msra.mxu0 %v641
    %745 = vmatpush.msra.mxu0 %v637
    %746 = vmatpush.msra.mxu0 %v633
    %747 = vmatpush.msra.mxu0 %v629
    %748 = vmatpush.msra.mxu0 %v625
    %749 = vmatmul.f32.gmra.mxu0 %v687
    %v750 = vpop.f32.mrf.mxu0
    %v751 = vadd.f32 0.0, %v750
    %752 = vdwg.mxu0
    %753 = vmatpush.msra.mxu0 %v686
    %754 = vmatpush.msra.mxu0 %v682
    %755 = vmatpush.msra.mxu0 %v678
    %756 = vmatpush.msra.mxu0 %v674
    %757 = vmatpush.msra.mxu0 %v670
    %758 = vmatpush.msra.mxu0 %v666
    %759 = vmatpush.msra.mxu0 %v662
    %760 = vmatpush.msra.mxu0 %v658
    %761 = vmatpush.msra.mxu0 %v654
    %762 = vmatpush.msra.mxu0 %v650
    %763 = vmatpush.msra.mxu0 %v646
    %764 = vmatpush.msra.mxu0 %v642
    %765 = vmatpush.msra.mxu0 %v638
    %766 = vmatpush.msra.mxu0 %v634
    %767 = vmatpush.msra.mxu0 %v630
    %768 = vmatpush.msra.mxu0 %v626
    %769 = vmatmul.f32.gmra.mxu0 %v687
    %v770 = vpop.f32.mrf.mxu0
    %v771 = vadd.f32 0.0, %v770
    %772 = vdwg.mxu0
    %v773 = vadd.f32 %v689, %v711
    %v774 = vadd.f32 %v690, %v731
    %v775 = vadd.f32 %v691, %v751
    %v776 = vadd.f32 %v692, %v771
    %v777 = vxor.u32 %v773, 2147483648
    %v778 = vmul.f32 %v777, 1.442695
    %v779 = vpow.pop %v778
    %v780 = vadd.f32 %v779, 1.0
    %v781 = vrcp.pop %v780
    %v782 = vmul.f32 %v780, %v781
    %v783 = vsub.f32 1.0, %v782
    %v784 = vmul.f32 %v781, %v783
    %v785 = vadd.f32 %v781, %v784
    %vm786 = vweird.f32 %v780
    %vm787 = vweird.f32 %v781
    %vm788 = vmor %vm786, %vm787
    %v789 = vsel %vm788, %v781, %v785
    %v790 = vand.u32 2147483647, %v780
    %vm791 = vcmp.eq.f32.partialorder %v790, 8.507059e+37
    %v792 = vand.u32 %v780, 2147483648
    %v793 = vor.u32 1.1754944e-38, %v792
    %v794 = vsel %vm791, %v793, %v789
    %v795 = vmul.f32 1.0, %v794
    %v796 = vxor.u32 %v774, 2147483648
    %v797 = vmul.f32 %v796, 1.442695
    %v798 = vpow.pop %v797
    %v799 = vadd.f32 %v798, 1.0
    %v800 = vrcp.pop %v799
    %v801 = vmul.f32 %v799, %v800
    %v802 = vsub.f32 1.0, %v801
    %v803 = vmul.f32 %v800, %v802
    %v804 = vadd.f32 %v800, %v803
    %vm805 = vweird.f32 %v799
    %vm806 = vweird.f32 %v800
    %vm807 = vmor %vm805, %vm806
    %v808 = vsel %vm807, %v800, %v804
    %v809 = vand.u32 2147483647, %v799
    %vm810 = vcmp.eq.f32.partialorder %v809, 8.507059e+37
    %v811 = vand.u32 %v799, 2147483648
    %v812 = vor.u32 1.1754944e-38, %v811
    %v813 = vsel %vm810, %v812, %v808
    %v814 = vmul.f32 1.0, %v813
    %v815 = vtanh.pop %v775
    %v816 = vxor.u32 %v776, 2147483648
    %v817 = vmul.f32 %v816, 1.442695
    %v818 = vpow.pop %v817
    %v819 = vadd.f32 %v818, 1.0
    %v820 = vrcp.pop %v819
    %v821 = vmul.f32 %v819, %v820
    %v822 = vsub.f32 1.0, %v821
    %v823 = vmul.f32 %v820, %v822
    %v824 = vadd.f32 %v820, %v823
    %vm825 = vweird.f32 %v819
    %vm826 = vweird.f32 %v820
    %vm827 = vmor %vm825, %vm826
    %v828 = vsel %vm827, %v820, %v824
    %v829 = vand.u32 2147483647, %v819
    %vm830 = vcmp.eq.f32.partialorder %v829, 8.507059e+37
    %v831 = vand.u32 %v819, 2147483648
    %v832 = vor.u32 1.1754944e-38, %v831
    %v833 = vsel %vm830, %v832, %v828
    %v834 = vmul.f32 1.0, %v833
    %v835 = vmul.f32 %v814, %v688
    %v836 = vmul.f32 %v795, %v815
    %v837 = vadd.f32 %v835, %v836
    %v838 = vtanh.pop %v837
    %v839 = vmul.f32 %v834, %v838
    %840 = vst [vmem:[#allocation14] sm:$0xff] %v839
    %v841 = vld [vmem:[#allocation2 + $0x20] sm:$0xff]
    %v842 = vld [vmem:[#allocation2 + $0x28] sm:$0xff]
    %v843 = vld [vmem:[#allocation2 + $0x30] sm:$0xff]
    %v844 = vld [vmem:[#allocation2 + $0x38] sm:$0xff]
    %845 = vmatpush.msra.mxu0 %v683
    %846 = vmatpush.msra.mxu0 %v679
    %847 = vmatpush.msra.mxu0 %v675
    %848 = vmatpush.msra.mxu0 %v671
    %849 = vmatpush.msra.mxu0 %v667
    %850 = vmatpush.msra.mxu0 %v663
    %851 = vmatpush.msra.mxu0 %v659
    %852 = vmatpush.msra.mxu0 %v655
    %853 = vmatpush.msra.mxu0 %v651
    %854 = vmatpush.msra.mxu0 %v647
    %855 = vmatpush.msra.mxu0 %v643
    %856 = vmatpush.msra.mxu0 %v639
    %857 = vmatpush.msra.mxu0 %v635
    %858 = vmatpush.msra.mxu0 %v631
    %859 = vmatpush.msra.mxu0 %v627
    %860 = vmatpush.msra.mxu0 %v623
    %861 = vmatmul.f32.gmra.mxu0 %v839
    %v862 = vpop.f32.mrf.mxu0
    %v863 = vadd.f32 0.0, %v862
    %864 = vdwg.mxu0
    %865 = vmatpush.msra.mxu0 %v684
    %866 = vmatpush.msra.mxu0 %v680
    %867 = vmatpush.msra.mxu0 %v676
    %868 = vmatpush.msra.mxu0 %v672
    %869 = vmatpush.msra.mxu0 %v668
    %870 = vmatpush.msra.mxu0 %v664
    %871 = vmatpush.msra.mxu0 %v660
    %872 = vmatpush.msra.mxu0 %v656
    %873 = vmatpush.msra.mxu0 %v652
    %874 = vmatpush.msra.mxu0 %v648
    %875 = vmatpush.msra.mxu0 %v644
    %876 = vmatpush.msra.mxu0 %v640
    %877 = vmatpush.msra.mxu0 %v636
    %878 = vmatpush.msra.mxu0 %v632
    %879 = vmatpush.msra.mxu0 %v628
    %880 = vmatpush.msra.mxu0 %v624
    %881 = vmatmul.f32.gmra.mxu0 %v839
    %v882 = vpop.f32.mrf.mxu0
    %v883 = vadd.f32 0.0, %v882
    %884 = vdwg.mxu0
    %885 = vmatpush.msra.mxu0 %v685
    %886 = vmatpush.msra.mxu0 %v681
    %887 = vmatpush.msra.mxu0 %v677
    %888 = vmatpush.msra.mxu0 %v673
    %889 = vmatpush.msra.mxu0 %v669
    %890 = vmatpush.msra.mxu0 %v665
    %891 = vmatpush.msra.mxu0 %v661
    %892 = vmatpush.msra.mxu0 %v657
    %893 = vmatpush.msra.mxu0 %v653
    %894 = vmatpush.msra.mxu0 %v649
    %895 = vmatpush.msra.mxu0 %v645
    %896 = vmatpush.msra.mxu0 %v641
    %897 = vmatpush.msra.mxu0 %v637
    %898 = vmatpush.msra.mxu0 %v633
    %899 = vmatpush.msra.mxu0 %v629
    %900 = vmatpush.msra.mxu0 %v625
    %901 = vmatmul.f32.gmra.mxu0 %v839
    %v902 = vpop.f32.mrf.mxu0
    %v903 = vadd.f32 0.0, %v902
    %904 = vdwg.mxu0
    %905 = vmatpush.msra.mxu0 %v686
    %906 = vmatpush.msra.mxu0 %v682
    %907 = vmatpush.msra.mxu0 %v678
    %908 = vmatpush.msra.mxu0 %v674
    %909 = vmatpush.msra.mxu0 %v670
    %910 = vmatpush.msra.mxu0 %v666
    %911 = vmatpush.msra.mxu0 %v662
    %912 = vmatpush.msra.mxu0 %v658
    %913 = vmatpush.msra.mxu0 %v654
    %914 = vmatpush.msra.mxu0 %v650
    %915 = vmatpush.msra.mxu0 %v646
    %916 = vmatpush.msra.mxu0 %v642
    %917 = vmatpush.msra.mxu0 %v638
    %918 = vmatpush.msra.mxu0 %v634
    %919 = vmatpush.msra.mxu0 %v630
    %920 = vmatpush.msra.mxu0 %v626
    %921 = vmatmul.f32.gmra.mxu0 %v839
    %v922 = vpop.f32.mrf.mxu0
    %v923 = vadd.f32 0.0, %v922
    %924 = vdwg.mxu0
    %v925 = vadd.f32 %v841, %v863
    %v926 = vadd.f32 %v842, %v883
    %v927 = vadd.f32 %v843, %v903
    %v928 = vadd.f32 %v844, %v923
    %v929 = vxor.u32 %v925, 2147483648
    %v930 = vmul.f32 %v929, 1.442695
    %v931 = vpow.pop %v930
    %v932 = vadd.f32 %v931, 1.0
    %v933 = vrcp.pop %v932
    %v934 = vmul.f32 %v932, %v933
    %v935 = vsub.f32 1.0, %v934
    %v936 = vmul.f32 %v933, %v935
    %v937 = vadd.f32 %v933, %v936
    %vm938 = vweird.f32 %v932
    %vm939 = vweird.f32 %v933
    %vm940 = vmor %vm938, %vm939
    %v941 = vsel %vm940, %v933, %v937
    %v942 = vand.u32 2147483647, %v932
    %vm943 = vcmp.eq.f32.partialorder %v942, 8.507059e+37
    %v944 = vand.u32 %v932, 2147483648
    %v945 = vor.u32 1.1754944e-38, %v944
    %v946 = vsel %vm943, %v945, %v941
    %v947 = vmul.f32 1.0, %v946
    %v948 = vxor.u32 %v926, 2147483648
    %v949 = vmul.f32 %v948, 1.442695
    %v950 = vpow.pop %v949
    %v951 = vadd.f32 %v950, 1.0
    %v952 = vrcp.pop %v951
    %v953 = vmul.f32 %v951, %v952
    %v954 = vsub.f32 1.0, %v953
    %v955 = vmul.f32 %v952, %v954
    %v956 = vadd.f32 %v952, %v955
    %vm957 = vweird.f32 %v951
    %vm958 = vweird.f32 %v952
    %vm959 = vmor %vm957, %vm958
    %v960 = vsel %vm959, %v952, %v956
    %v961 = vand.u32 2147483647, %v951
    %vm962 = vcmp.eq.f32.partialorder %v961, 8.507059e+37
    %v963 = vand.u32 %v951, 2147483648
    %v964 = vor.u32 1.1754944e-38, %v963
    %v965 = vsel %vm962, %v964, %v960
    %v966 = vmul.f32 1.0, %v965
    %v967 = vtanh.pop %v927
    %v968 = vxor.u32 %v928, 2147483648
    %v969 = vmul.f32 %v968, 1.442695
    %v970 = vpow.pop %v969
    %v971 = vadd.f32 %v970, 1.0
    %v972 = vrcp.pop %v971
    %v973 = vmul.f32 %v971, %v972
    %v974 = vsub.f32 1.0, %v973
    %v975 = vmul.f32 %v972, %v974
    %v976 = vadd.f32 %v972, %v975
    %vm977 = vweird.f32 %v971
    %vm978 = vweird.f32 %v972
    %vm979 = vmor %vm977, %vm978
    %v980 = vsel %vm979, %v972, %v976
    %v981 = vand.u32 2147483647, %v971
    %vm982 = vcmp.eq.f32.partialorder %v981, 8.507059e+37
    %v983 = vand.u32 %v971, 2147483648
    %v984 = vor.u32 1.1754944e-38, %v983
    %v985 = vsel %vm982, %v984, %v980
    %v986 = vmul.f32 1.0, %v985
    %v987 = vmul.f32 %v966, %v837
    %v988 = vmul.f32 %v947, %v967
    %v989 = vadd.f32 %v987, %v988
    %v990 = vtanh.pop %v989
    %v991 = vmul.f32 %v986, %v990
    %992 = vst [vmem:[#allocation14 + $0x8] sm:$0xff] %v991
    %v993 = vld [vmem:[#allocation2 + $0x40] sm:$0xff]
    %v994 = vld [vmem:[#allocation2 + $0x48] sm:$0xff]
    %v995 = vld [vmem:[#allocation2 + $0x50] sm:$0xff]
    %v996 = vld [vmem:[#allocation2 + $0x58] sm:$0xff]
    %997 = vmatpush.msra.mxu0 %v683
    %998 = vmatpush.msra.mxu0 %v679
    %999 = vmatpush.msra.mxu0 %v675
    %1000 = vmatpush.msra.mxu0 %v671
    %1001 = vmatpush.msra.mxu0 %v667
    %1002 = vmatpush.msra.mxu0 %v663
    %1003 = vmatpush.msra.mxu0 %v659
    %1004 = vmatpush.msra.mxu0 %v655
    %1005 = vmatpush.msra.mxu0 %v651
    %1006 = vmatpush.msra.mxu0 %v647
    %1007 = vmatpush.msra.mxu0 %v643
    %1008 = vmatpush.msra.mxu0 %v639
    %1009 = vmatpush.msra.mxu0 %v635
    %1010 = vmatpush.msra.mxu0 %v631
    %1011 = vmatpush.msra.mxu0 %v627
    %1012 = vmatpush.msra.mxu0 %v623
    %1013 = vmatmul.f32.gmra.mxu0 %v991
    %v1014 = vpop.f32.mrf.mxu0
    %v1015 = vadd.f32 0.0, %v1014
    %1016 = vdwg.mxu0
    %1017 = vmatpush.msra.mxu0 %v684
    %1018 = vmatpush.msra.mxu0 %v680
    %1019 = vmatpush.msra.mxu0 %v676
    %1020 = vmatpush.msra.mxu0 %v672
    %1021 = vmatpush.msra.mxu0 %v668
    %1022 = vmatpush.msra.mxu0 %v664
    %1023 = vmatpush.msra.mxu0 %v660
    %1024 = vmatpush.msra.mxu0 %v656
    %1025 = vmatpush.msra.mxu0 %v652
    %1026 = vmatpush.msra.mxu0 %v648
    %1027 = vmatpush.msra.mxu0 %v644
    %1028 = vmatpush.msra.mxu0 %v640
    %1029 = vmatpush.msra.mxu0 %v636
    %1030 = vmatpush.msra.mxu0 %v632
    %1031 = vmatpush.msra.mxu0 %v628
    %1032 = vmatpush.msra.mxu0 %v624
    %1033 = vmatmul.f32.gmra.mxu0 %v991
    %v1034 = vpop.f32.mrf.mxu0
    %v1035 = vadd.f32 0.0, %v1034
    %1036 = vdwg.mxu0
    %1037 = vmatpush.msra.mxu0 %v685
    %1038 = vmatpush.msra.mxu0 %v681
    %1039 = vmatpush.msra.mxu0 %v677
    %1040 = vmatpush.msra.mxu0 %v673
    %1041 = vmatpush.msra.mxu0 %v669
    %1042 = vmatpush.msra.mxu0 %v665
    %1043 = vmatpush.msra.mxu0 %v661
    %1044 = vmatpush.msra.mxu0 %v657
    %1045 = vmatpush.msra.mxu0 %v653
    %1046 = vmatpush.msra.mxu0 %v649
    %1047 = vmatpush.msra.mxu0 %v645
    %1048 = vmatpush.msra.mxu0 %v641
    %1049 = vmatpush.msra.mxu0 %v637
    %1050 = vmatpush.msra.mxu0 %v633
    %1051 = vmatpush.msra.mxu0 %v629
    %1052 = vmatpush.msra.mxu0 %v625
    %1053 = vmatmul.f32.gmra.mxu0 %v991
    %v1054 = vpop.f32.mrf.mxu0
    %v1055 = vadd.f32 0.0, %v1054
    %1056 = vdwg.mxu0
    %1057 = vmatpush.msra.mxu0 %v686
    %1058 = vmatpush.msra.mxu0 %v682
    %1059 = vmatpush.msra.mxu0 %v678
    %1060 = vmatpush.msra.mxu0 %v674
    %1061 = vmatpush.msra.mxu0 %v670
    %1062 = vmatpush.msra.mxu0 %v666
    %1063 = vmatpush.msra.mxu0 %v662
    %1064 = vmatpush.msra.mxu0 %v658
    %1065 = vmatpush.msra.mxu0 %v654
    %1066 = vmatpush.msra.mxu0 %v650
    %1067 = vmatpush.msra.mxu0 %v646
    %1068 = vmatpush.msra.mxu0 %v642
    %1069 = vmatpush.msra.mxu0 %v638
    %1070 = vmatpush.msra.mxu0 %v634
    %1071 = vmatpush.msra.mxu0 %v630
    %1072 = vmatpush.msra.mxu0 %v626
    %1073 = vmatmul.f32.gmra.mxu0 %v991
    %v1074 = vpop.f32.mrf.mxu0
    %v1075 = vadd.f32 0.0, %v1074
    %1076 = vdwg.mxu0
    %v1077 = vadd.f32 %v993, %v1015
    %v1078 = vadd.f32 %v994, %v1035
    %v1079 = vadd.f32 %v995, %v1055
    %v1080 = vadd.f32 %v996, %v1075
    %v1081 = vxor.u32 %v1077, 2147483648
    %v1082 = vmul.f32 %v1081, 1.442695
    %v1083 = vpow.pop %v1082
    %v1084 = vadd.f32 %v1083, 1.0
    %v1085 = vrcp.pop %v1084
    %v1086 = vmul.f32 %v1084, %v1085
    %v1087 = vsub.f32 1.0, %v1086
    %v1088 = vmul.f32 %v1085, %v1087
    %v1089 = vadd.f32 %v1085, %v1088
    %vm1090 = vweird.f32 %v1084
    %vm1091 = vweird.f32 %v1085
    %vm1092 = vmor %vm1090, %vm1091
    %v1093 = vsel %vm1092, %v1085, %v1089
    %v1094 = vand.u32 2147483647, %v1084
    %vm1095 = vcmp.eq.f32.partialorder %v1094, 8.507059e+37
    %v1096 = vand.u32 %v1084, 2147483648
    %v1097 = vor.u32 1.1754944e-38, %v1096
    %v1098 = vsel %vm1095, %v1097, %v1093
    %v1099 = vmul.f32 1.0, %v1098
    %v1100 = vxor.u32 %v1078, 2147483648
    %v1101 = vmul.f32 %v1100, 1.442695
    %v1102 = vpow.pop %v1101
    %v1103 = vadd.f32 %v1102, 1.0
    %v1104 = vrcp.pop %v1103
    %v1105 = vmul.f32 %v1103, %v1104
    %v1106 = vsub.f32 1.0, %v1105
    %v1107 = vmul.f32 %v1104, %v1106
    %v1108 = vadd.f32 %v1104, %v1107
    %vm1109 = vweird.f32 %v1103
    %vm1110 = vweird.f32 %v1104
    %vm1111 = vmor %vm1109, %vm1110
    %v1112 = vsel %vm1111, %v1104, %v1108
    %v1113 = vand.u32 2147483647, %v1103
    %vm1114 = vcmp.eq.f32.partialorder %v1113, 8.507059e+37
    %v1115 = vand.u32 %v1103, 2147483648
    %v1116 = vor.u32 1.1754944e-38, %v1115
    %v1117 = vsel %vm1114, %v1116, %v1112
    %v1118 = vmul.f32 1.0, %v1117
    %v1119 = vtanh.pop %v1079
    %v1120 = vxor.u32 %v1080, 2147483648
    %v1121 = vmul.f32 %v1120, 1.442695
    %v1122 = vpow.pop %v1121
    %v1123 = vadd.f32 %v1122, 1.0
    %v1124 = vrcp.pop %v1123
    %v1125 = vmul.f32 %v1123, %v1124
    %v1126 = vsub.f32 1.0, %v1125
    %v1127 = vmul.f32 %v1124, %v1126
    %v1128 = vadd.f32 %v1124, %v1127
    %vm1129 = vweird.f32 %v1123
    %vm1130 = vweird.f32 %v1124
    %vm1131 = vmor %vm1129, %vm1130
    %v1132 = vsel %vm1131, %v1124, %v1128
    %v1133 = vand.u32 2147483647, %v1123
    %vm1134 = vcmp.eq.f32.partialorder %v1133, 8.507059e+37
    %v1135 = vand.u32 %v1123, 2147483648
    %v1136 = vor.u32 1.1754944e-38, %v1135
    %v1137 = vsel %vm1134, %v1136, %v1132
    %v1138 = vmul.f32 1.0, %v1137
    %v1139 = vmul.f32 %v1118, %v989
    %v1140 = vmul.f32 %v1099, %v1119
    %v1141 = vadd.f32 %v1139, %v1140
    %v1142 = vtanh.pop %v1141
    %v1143 = vmul.f32 %v1138, %v1142
    %1144 = vst [vmem:[#allocation14 + $0x10] sm:$0xff] %v1143
    %v1145 = vld [vmem:[#allocation2 + $0x60] sm:$0xff]
    %v1146 = vld [vmem:[#allocation2 + $0x68] sm:$0xff]
    %v1147 = vld [vmem:[#allocation2 + $0x70] sm:$0xff]
    %v1148 = vld [vmem:[#allocation2 + $0x78] sm:$0xff]
    %1149 = vmatpush.msra.mxu0 %v683
    %1150 = vmatpush.msra.mxu0 %v679
    %1151 = vmatpush.msra.mxu0 %v675
    %1152 = vmatpush.msra.mxu0 %v671
    %1153 = vmatpush.msra.mxu0 %v667
    %1154 = vmatpush.msra.mxu0 %v663
    %1155 = vmatpush.msra.mxu0 %v659
    %1156 = vmatpush.msra.mxu0 %v655
    %1157 = vmatpush.msra.mxu0 %v651
    %1158 = vmatpush.msra.mxu0 %v647
    %1159 = vmatpush.msra.mxu0 %v643
    %1160 = vmatpush.msra.mxu0 %v639
    %1161 = vmatpush.msra.mxu0 %v635
    %1162 = vmatpush.msra.mxu0 %v631
    %1163 = vmatpush.msra.mxu0 %v627
    %1164 = vmatpush.msra.mxu0 %v623
    %1165 = vmatmul.f32.gmra.mxu0 %v1143
    %v1166 = vpop.f32.mrf.mxu0
    %v1167 = vadd.f32 0.0, %v1166
    %1168 = vdwg.mxu0
    %1169 = vmatpush.msra.mxu0 %v684
    %1170 = vmatpush.msra.mxu0 %v680
    %1171 = vmatpush.msra.mxu0 %v676
    %1172 = vmatpush.msra.mxu0 %v672
    %1173 = vmatpush.msra.mxu0 %v668
    %1174 = vmatpush.msra.mxu0 %v664
    %1175 = vmatpush.msra.mxu0 %v660
    %1176 = vmatpush.msra.mxu0 %v656
    %1177 = vmatpush.msra.mxu0 %v652
    %1178 = vmatpush.msra.mxu0 %v648
    %1179 = vmatpush.msra.mxu0 %v644
    %1180 = vmatpush.msra.mxu0 %v640
    %1181 = vmatpush.msra.mxu0 %v636
    %1182 = vmatpush.msra.mxu0 %v632
    %1183 = vmatpush.msra.mxu0 %v628
    %1184 = vmatpush.msra.mxu0 %v624
    %1185 = vmatmul.f32.gmra.mxu0 %v1143
    %v1186 = vpop.f32.mrf.mxu0
    %v1187 = vadd.f32 0.0, %v1186
    %1188 = vdwg.mxu0
    %1189 = vmatpush.msra.mxu0 %v685
    %1190 = vmatpush.msra.mxu0 %v681
    %1191 = vmatpush.msra.mxu0 %v677
    %1192 = vmatpush.msra.mxu0 %v673
    %1193 = vmatpush.msra.mxu0 %v669
    %1194 = vmatpush.msra.mxu0 %v665
    %1195 = vmatpush.msra.mxu0 %v661
    %1196 = vmatpush.msra.mxu0 %v657
    %1197 = vmatpush.msra.mxu0 %v653
    %1198 = vmatpush.msra.mxu0 %v649
    %1199 = vmatpush.msra.mxu0 %v645
    %1200 = vmatpush.msra.mxu0 %v641
    %1201 = vmatpush.msra.mxu0 %v637
    %1202 = vmatpush.msra.mxu0 %v633
    %1203 = vmatpush.msra.mxu0 %v629
    %1204 = vmatpush.msra.mxu0 %v625
    %1205 = vmatmul.f32.gmra.mxu0 %v1143
    %v1206 = vpop.f32.mrf.mxu0
    %v1207 = vadd.f32 0.0, %v1206
    %1208 = vdwg.mxu0
    %1209 = vmatpush.msra.mxu0 %v686
    %1210 = vmatpush.msra.mxu0 %v682
    %1211 = vmatpush.msra.mxu0 %v678
    %1212 = vmatpush.msra.mxu0 %v674
    %1213 = vmatpush.msra.mxu0 %v670
    %1214 = vmatpush.msra.mxu0 %v666
    %1215 = vmatpush.msra.mxu0 %v662
    %1216 = vmatpush.msra.mxu0 %v658
    %1217 = vmatpush.msra.mxu0 %v654
    %1218 = vmatpush.msra.mxu0 %v650
    %1219 = vmatpush.msra.mxu0 %v646
    %1220 = vmatpush.msra.mxu0 %v642
    %1221 = vmatpush.msra.mxu0 %v638
    %1222 = vmatpush.msra.mxu0 %v634
    %1223 = vmatpush.msra.mxu0 %v630
    %1224 = vmatpush.msra.mxu0 %v626
    %1225 = vmatmul.f32.gmra.mxu0 %v1143
    %v1226 = vpop.f32.mrf.mxu0
    %v1227 = vadd.f32 0.0, %v1226
    %1228 = vdwg.mxu0
    %v1229 = vadd.f32 %v1145, %v1167
    %v1230 = vadd.f32 %v1146, %v1187
    %v1231 = vadd.f32 %v1147, %v1207
    %v1232 = vadd.f32 %v1148, %v1227
    %v1233 = vxor.u32 %v1229, 2147483648
    %v1234 = vmul.f32 %v1233, 1.442695
    %v1235 = vpow.pop %v1234
    %v1236 = vadd.f32 %v1235, 1.0
    %v1237 = vrcp.pop %v1236
    %v1238 = vmul.f32 %v1236, %v1237
    %v1239 = vsub.f32 1.0, %v1238
    %v1240 = vmul.f32 %v1237, %v1239
    %v1241 = vadd.f32 %v1237, %v1240
    %vm1242 = vweird.f32 %v1236
    %vm1243 = vweird.f32 %v1237
    %vm1244 = vmor %vm1242, %vm1243
    %v1245 = vsel %vm1244, %v1237, %v1241
    %v1246 = vand.u32 2147483647, %v1236
    %vm1247 = vcmp.eq.f32.partialorder %v1246, 8.507059e+37
    %v1248 = vand.u32 %v1236, 2147483648
    %v1249 = vor.u32 1.1754944e-38, %v1248
    %v1250 = vsel %vm1247, %v1249, %v1245
    %v1251 = vmul.f32 1.0, %v1250
    %v1252 = vxor.u32 %v1230, 2147483648
    %v1253 = vmul.f32 %v1252, 1.442695
    %v1254 = vpow.pop %v1253
    %v1255 = vadd.f32 %v1254, 1.0
    %v1256 = vrcp.pop %v1255
    %v1257 = vmul.f32 %v1255, %v1256
    %v1258 = vsub.f32 1.0, %v1257
    %v1259 = vmul.f32 %v1256, %v1258
    %v1260 = vadd.f32 %v1256, %v1259
    %vm1261 = vweird.f32 %v1255
    %vm1262 = vweird.f32 %v1256
    %vm1263 = vmor %vm1261, %vm1262
    %v1264 = vsel %vm1263, %v1256, %v1260
    %v1265 = vand.u32 2147483647, %v1255
    %vm1266 = vcmp.eq.f32.partialorder %v1265, 8.507059e+37
    %v1267 = vand.u32 %v1255, 2147483648
    %v1268 = vor.u32 1.1754944e-38, %v1267
    %v1269 = vsel %vm1266, %v1268, %v1264
    %v1270 = vmul.f32 1.0, %v1269
    %v1271 = vtanh.pop %v1231
    %v1272 = vxor.u32 %v1232, 2147483648
    %v1273 = vmul.f32 %v1272, 1.442695
    %v1274 = vpow.pop %v1273
    %v1275 = vadd.f32 %v1274, 1.0
    %v1276 = vrcp.pop %v1275
    %v1277 = vmul.f32 %v1275, %v1276
    %v1278 = vsub.f32 1.0, %v1277
    %v1279 = vmul.f32 %v1276, %v1278
    %v1280 = vadd.f32 %v1276, %v1279
    %vm1281 = vweird.f32 %v1275
    %vm1282 = vweird.f32 %v1276
    %vm1283 = vmor %vm1281, %vm1282
    %v1284 = vsel %vm1283, %v1276, %v1280
    %v1285 = vand.u32 2147483647, %v1275
    %vm1286 = vcmp.eq.f32.partialorder %v1285, 8.507059e+37
    %v1287 = vand.u32 %v1275, 2147483648
    %v1288 = vor.u32 1.1754944e-38, %v1287
    %v1289 = vsel %vm1286, %v1288, %v1284
    %v1290 = vmul.f32 1.0, %v1289
    %v1291 = vmul.f32 %v1270, %v1141
    %v1292 = vmul.f32 %v1251, %v1271
    %v1293 = vadd.f32 %v1291, %v1292
    %v1294 = vtanh.pop %v1293
    %v1295 = vmul.f32 %v1290, %v1294
    %1296 = vst [vmem:[#allocation14 + $0x18] sm:$0xff] %v1295
    %v1297 = vld [vmem:[#allocation2 + $0x80] sm:$0xff]
    %v1298 = vld [vmem:[#allocation2 + $0x88] sm:$0xff]
    %v1299 = vld [vmem:[#allocation2 + $0x90] sm:$0xff]
    %v1300 = vld [vmem:[#allocation2 + $0x98] sm:$0xff]
    %1301 = vmatpush.msra.mxu0 %v683
    %1302 = vmatpush.msra.mxu0 %v679
    %1303 = vmatpush.msra.mxu0 %v675
    %1304 = vmatpush.msra.mxu0 %v671
    %1305 = vmatpush.msra.mxu0 %v667
    %1306 = vmatpush.msra.mxu0 %v663
    %1307 = vmatpush.msra.mxu0 %v659
    %1308 = vmatpush.msra.mxu0 %v655
    %1309 = vmatpush.msra.mxu0 %v651
    %1310 = vmatpush.msra.mxu0 %v647
    %1311 = vmatpush.msra.mxu0 %v643
    %1312 = vmatpush.msra.mxu0 %v639
    %1313 = vmatpush.msra.mxu0 %v635
    %1314 = vmatpush.msra.mxu0 %v631
    %1315 = vmatpush.msra.mxu0 %v627
    %1316 = vmatpush.msra.mxu0 %v623
    %1317 = vmatmul.f32.gmra.mxu0 %v1295
    %v1318 = vpop.f32.mrf.mxu0
    %v1319 = vadd.f32 0.0, %v1318
    %1320 = vdwg.mxu0
    %1321 = vmatpush.msra.mxu0 %v684
    %1322 = vmatpush.msra.mxu0 %v680
    %1323 = vmatpush.msra.mxu0 %v676
    %1324 = vmatpush.msra.mxu0 %v672
    %1325 = vmatpush.msra.mxu0 %v668
    %1326 = vmatpush.msra.mxu0 %v664
    %1327 = vmatpush.msra.mxu0 %v660
    %1328 = vmatpush.msra.mxu0 %v656
    %1329 = vmatpush.msra.mxu0 %v652
    %1330 = vmatpush.msra.mxu0 %v648
    %1331 = vmatpush.msra.mxu0 %v644
    %1332 = vmatpush.msra.mxu0 %v640
    %1333 = vmatpush.msra.mxu0 %v636
    %1334 = vmatpush.msra.mxu0 %v632
    %1335 = vmatpush.msra.mxu0 %v628
    %1336 = vmatpush.msra.mxu0 %v624
    %1337 = vmatmul.f32.gmra.mxu0 %v1295
    %v1338 = vpop.f32.mrf.mxu0
    %v1339 = vadd.f32 0.0, %v1338
    %1340 = vdwg.mxu0
    %1341 = vmatpush.msra.mxu0 %v685
    %1342 = vmatpush.msra.mxu0 %v681
    %1343 = vmatpush.msra.mxu0 %v677
    %1344 = vmatpush.msra.mxu0 %v673
    %1345 = vmatpush.msra.mxu0 %v669
    %1346 = vmatpush.msra.mxu0 %v665
    %1347 = vmatpush.msra.mxu0 %v661
    %1348 = vmatpush.msra.mxu0 %v657
    %1349 = vmatpush.msra.mxu0 %v653
    %1350 = vmatpush.msra.mxu0 %v649
    %1351 = vmatpush.msra.mxu0 %v645
    %1352 = vmatpush.msra.mxu0 %v641
    %1353 = vmatpush.msra.mxu0 %v637
    %1354 = vmatpush.msra.mxu0 %v633
    %1355 = vmatpush.msra.mxu0 %v629
    %1356 = vmatpush.msra.mxu0 %v625
    %1357 = vmatmul.f32.gmra.mxu0 %v1295
    %v1358 = vpop.f32.mrf.mxu0
    %v1359 = vadd.f32 0.0, %v1358
    %1360 = vdwg.mxu0
    %1361 = vmatpush.msra.mxu0 %v686
    %1362 = vmatpush.msra.mxu0 %v682
    %1363 = vmatpush.msra.mxu0 %v678
    %1364 = vmatpush.msra.mxu0 %v674
    %1365 = vmatpush.msra.mxu0 %v670
    %1366 = vmatpush.msra.mxu0 %v666
    %1367 = vmatpush.msra.mxu0 %v662
    %1368 = vmatpush.msra.mxu0 %v658
    %1369 = vmatpush.msra.mxu0 %v654
    %1370 = vmatpush.msra.mxu0 %v650
    %1371 = vmatpush.msra.mxu0 %v646
    %1372 = vmatpush.msra.mxu0 %v642
    %1373 = vmatpush.msra.mxu0 %v638
    %1374 = vmatpush.msra.mxu0 %v634
    %1375 = vmatpush.msra.mxu0 %v630
    %1376 = vmatpush.msra.mxu0 %v626
    %1377 = vmatmul.f32.gmra.mxu0 %v1295
    %v1378 = vpop.f32.mrf.mxu0
    %v1379 = vadd.f32 0.0, %v1378
    %1380 = vdwg.mxu0
    %v1381 = vadd.f32 %v1297, %v1319
    %v1382 = vadd.f32 %v1298, %v1339
    %v1383 = vadd.f32 %v1299, %v1359
    %v1384 = vadd.f32 %v1300, %v1379
    %v1385 = vxor.u32 %v1381, 2147483648
    %v1386 = vmul.f32 %v1385, 1.442695
    %v1387 = vpow.pop %v1386
    %v1388 = vadd.f32 %v1387, 1.0
    %v1389 = vrcp.pop %v1388
    %v1390 = vmul.f32 %v1388, %v1389
    %v1391 = vsub.f32 1.0, %v1390
    %v1392 = vmul.f32 %v1389, %v1391
    %v1393 = vadd.f32 %v1389, %v1392
    %vm1394 = vweird.f32 %v1388
    %vm1395 = vweird.f32 %v1389
    %vm1396 = vmor %vm1394, %vm1395
    %v1397 = vsel %vm1396, %v1389, %v1393
    %v1398 = vand.u32 2147483647, %v1388
    %vm1399 = vcmp.eq.f32.partialorder %v1398, 8.507059e+37
    %v1400 = vand.u32 %v1388, 2147483648
    %v1401 = vor.u32 1.1754944e-38, %v1400
    %v1402 = vsel %vm1399, %v1401, %v1397
    %v1403 = vmul.f32 1.0, %v1402
    %v1404 = vxor.u32 %v1382, 2147483648
    %v1405 = vmul.f32 %v1404, 1.442695
    %v1406 = vpow.pop %v1405
    %v1407 = vadd.f32 %v1406, 1.0
    %v1408 = vrcp.pop %v1407
    %v1409 = vmul.f32 %v1407, %v1408
    %v1410 = vsub.f32 1.0, %v1409
    %v1411 = vmul.f32 %v1408, %v1410
    %v1412 = vadd.f32 %v1408, %v1411
    %vm1413 = vweird.f32 %v1407
    %vm1414 = vweird.f32 %v1408
    %vm1415 = vmor %vm1413, %vm1414
    %v1416 = vsel %vm1415, %v1408, %v1412
    %v1417 = vand.u32 2147483647, %v1407
    %vm1418 = vcmp.eq.f32.partialorder %v1417, 8.507059e+37
    %v1419 = vand.u32 %v1407, 2147483648
    %v1420 = vor.u32 1.1754944e-38, %v1419
    %v1421 = vsel %vm1418, %v1420, %v1416
    %v1422 = vmul.f32 1.0, %v1421
    %v1423 = vtanh.pop %v1383
    %v1424 = vxor.u32 %v1384, 2147483648
    %v1425 = vmul.f32 %v1424, 1.442695
    %v1426 = vpow.pop %v1425
    %v1427 = vadd.f32 %v1426, 1.0
    %v1428 = vrcp.pop %v1427
    %v1429 = vmul.f32 %v1427, %v1428
    %v1430 = vsub.f32 1.0, %v1429
    %v1431 = vmul.f32 %v1428, %v1430
    %v1432 = vadd.f32 %v1428, %v1431
    %vm1433 = vweird.f32 %v1427
    %vm1434 = vweird.f32 %v1428
    %vm1435 = vmor %vm1433, %vm1434
    %v1436 = vsel %vm1435, %v1428, %v1432
    %v1437 = vand.u32 2147483647, %v1427
    %vm1438 = vcmp.eq.f32.partialorder %v1437, 8.507059e+37
    %v1439 = vand.u32 %v1427, 2147483648
    %v1440 = vor.u32 1.1754944e-38, %v1439
    %v1441 = vsel %vm1438, %v1440, %v1436
    %v1442 = vmul.f32 1.0, %v1441
    %v1443 = vmul.f32 %v1422, %v1293
    %v1444 = vmul.f32 %v1403, %v1423
    %v1445 = vadd.f32 %v1443, %v1444
    %v1446 = vtanh.pop %v1445
    %v1447 = vmul.f32 %v1442, %v1446
    %1448 = vst [vmem:[#allocation14 + $0x20] sm:$0xff] %v1447
    %v1449 = vld [vmem:[#allocation2 + $0xa0] sm:$0xff]
    %v1450 = vld [vmem:[#allocation2 + $0xa8] sm:$0xff]
    %v1451 = vld [vmem:[#allocation2 + $0xb0] sm:$0xff]
    %v1452 = vld [vmem:[#allocation2 + $0xb8] sm:$0xff]
    %1453 = vmatpush.msra.mxu0 %v683
    %1454 = vmatpush.msra.mxu0 %v679
    %1455 = vmatpush.msra.mxu0 %v675
    %1456 = vmatpush.msra.mxu0 %v671
    %1457 = vmatpush.msra.mxu0 %v667
    %1458 = vmatpush.msra.mxu0 %v663
    %1459 = vmatpush.msra.mxu0 %v659
    %1460 = vmatpush.msra.mxu0 %v655
    %1461 = vmatpush.msra.mxu0 %v651
    %1462 = vmatpush.msra.mxu0 %v647
    %1463 = vmatpush.msra.mxu0 %v643
    %1464 = vmatpush.msra.mxu0 %v639
    %1465 = vmatpush.msra.mxu0 %v635
    %1466 = vmatpush.msra.mxu0 %v631
    %1467 = vmatpush.msra.mxu0 %v627
    %1468 = vmatpush.msra.mxu0 %v623
    %1469 = vmatmul.f32.gmra.mxu0 %v1447
    %v1470 = vpop.f32.mrf.mxu0
    %v1471 = vadd.f32 0.0, %v1470
    %1472 = vdwg.mxu0
    %1473 = vmatpush.msra.mxu0 %v684
    %1474 = vmatpush.msra.mxu0 %v680
    %1475 = vmatpush.msra.mxu0 %v676
    %1476 = vmatpush.msra.mxu0 %v672
    %1477 = vmatpush.msra.mxu0 %v668
    %1478 = vmatpush.msra.mxu0 %v664
    %1479 = vmatpush.msra.mxu0 %v660
    %1480 = vmatpush.msra.mxu0 %v656
    %1481 = vmatpush.msra.mxu0 %v652
    %1482 = vmatpush.msra.mxu0 %v648
    %1483 = vmatpush.msra.mxu0 %v644
    %1484 = vmatpush.msra.mxu0 %v640
    %1485 = vmatpush.msra.mxu0 %v636
    %1486 = vmatpush.msra.mxu0 %v632
    %1487 = vmatpush.msra.mxu0 %v628
    %1488 = vmatpush.msra.mxu0 %v624
    %1489 = vmatmul.f32.gmra.mxu0 %v1447
    %v1490 = vpop.f32.mrf.mxu0
    %v1491 = vadd.f32 0.0, %v1490
    %1492 = vdwg.mxu0
    %1493 = vmatpush.msra.mxu0 %v685
    %1494 = vmatpush.msra.mxu0 %v681
    %1495 = vmatpush.msra.mxu0 %v677
    %1496 = vmatpush.msra.mxu0 %v673
    %1497 = vmatpush.msra.mxu0 %v669
    %1498 = vmatpush.msra.mxu0 %v665
    %1499 = vmatpush.msra.mxu0 %v661
    %1500 = vmatpush.msra.mxu0 %v657
    %1501 = vmatpush.msra.mxu0 %v653
    %1502 = vmatpush.msra.mxu0 %v649
    %1503 = vmatpush.msra.mxu0 %v645
    %1504 = vmatpush.msra.mxu0 %v641
    %1505 = vmatpush.msra.mxu0 %v637
    %1506 = vmatpush.msra.mxu0 %v633
    %1507 = vmatpush.msra.mxu0 %v629
    %1508 = vmatpush.msra.mxu0 %v625
    %1509 = vmatmul.f32.gmra.mxu0 %v1447
    %v1510 = vpop.f32.mrf.mxu0
    %v1511 = vadd.f32 0.0, %v1510
    %1512 = vdwg.mxu0
    %1513 = vmatpush.msra.mxu0 %v686
    %1514 = vmatpush.msra.mxu0 %v682
    %1515 = vmatpush.msra.mxu0 %v678
    %1516 = vmatpush.msra.mxu0 %v674
    %1517 = vmatpush.msra.mxu0 %v670
    %1518 = vmatpush.msra.mxu0 %v666
    %1519 = vmatpush.msra.mxu0 %v662
    %1520 = vmatpush.msra.mxu0 %v658
    %1521 = vmatpush.msra.mxu0 %v654
    %1522 = vmatpush.msra.mxu0 %v650
    %1523 = vmatpush.msra.mxu0 %v646
    %1524 = vmatpush.msra.mxu0 %v642
    %1525 = vmatpush.msra.mxu0 %v638
    %1526 = vmatpush.msra.mxu0 %v634
    %1527 = vmatpush.msra.mxu0 %v630
    %1528 = vmatpush.msra.mxu0 %v626
    %1529 = vmatmul.f32.gmra.mxu0 %v1447
    %v1530 = vpop.f32.mrf.mxu0
    %v1531 = vadd.f32 0.0, %v1530
    %1532 = vdwg.mxu0
    %v1533 = vadd.f32 %v1449, %v1471
    %v1534 = vadd.f32 %v1450, %v1491
    %v1535 = vadd.f32 %v1451, %v1511
    %v1536 = vadd.f32 %v1452, %v1531
    %v1537 = vxor.u32 %v1533, 2147483648
    %v1538 = vmul.f32 %v1537, 1.442695
    %v1539 = vpow.pop %v1538
    %v1540 = vadd.f32 %v1539, 1.0
    %v1541 = vrcp.pop %v1540
    %v1542 = vmul.f32 %v1540, %v1541
    %v1543 = vsub.f32 1.0, %v1542
    %v1544 = vmul.f32 %v1541, %v1543
    %v1545 = vadd.f32 %v1541, %v1544
    %vm1546 = vweird.f32 %v1540
    %vm1547 = vweird.f32 %v1541
    %vm1548 = vmor %vm1546, %vm1547
    %v1549 = vsel %vm1548, %v1541, %v1545
    %v1550 = vand.u32 2147483647, %v1540
    %vm1551 = vcmp.eq.f32.partialorder %v1550, 8.507059e+37
    %v1552 = vand.u32 %v1540, 2147483648
    %v1553 = vor.u32 1.1754944e-38, %v1552
    %v1554 = vsel %vm1551, %v1553, %v1549
    %v1555 = vmul.f32 1.0, %v1554
    %v1556 = vxor.u32 %v1534, 2147483648
    %v1557 = vmul.f32 %v1556, 1.442695
    %v1558 = vpow.pop %v1557
    %v1559 = vadd.f32 %v1558, 1.0
    %v1560 = vrcp.pop %v1559
    %v1561 = vmul.f32 %v1559, %v1560
    %v1562 = vsub.f32 1.0, %v1561
    %v1563 = vmul.f32 %v1560, %v1562
    %v1564 = vadd.f32 %v1560, %v1563
    %vm1565 = vweird.f32 %v1559
    %vm1566 = vweird.f32 %v1560
    %vm1567 = vmor %vm1565, %vm1566
    %v1568 = vsel %vm1567, %v1560, %v1564
    %v1569 = vand.u32 2147483647, %v1559
    %vm1570 = vcmp.eq.f32.partialorder %v1569, 8.507059e+37
    %v1571 = vand.u32 %v1559, 2147483648
    %v1572 = vor.u32 1.1754944e-38, %v1571
    %v1573 = vsel %vm1570, %v1572, %v1568
    %v1574 = vmul.f32 1.0, %v1573
    %v1575 = vtanh.pop %v1535
    %v1576 = vxor.u32 %v1536, 2147483648
    %v1577 = vmul.f32 %v1576, 1.442695
    %v1578 = vpow.pop %v1577
    %v1579 = vadd.f32 %v1578, 1.0
    %v1580 = vrcp.pop %v1579
    %v1581 = vmul.f32 %v1579, %v1580
    %v1582 = vsub.f32 1.0, %v1581
    %v1583 = vmul.f32 %v1580, %v1582
    %v1584 = vadd.f32 %v1580, %v1583
    %vm1585 = vweird.f32 %v1579
    %vm1586 = vweird.f32 %v1580
    %vm1587 = vmor %vm1585, %vm1586
    %v1588 = vsel %vm1587, %v1580, %v1584
    %v1589 = vand.u32 2147483647, %v1579
    %vm1590 = vcmp.eq.f32.partialorder %v1589, 8.507059e+37
    %v1591 = vand.u32 %v1579, 2147483648
    %v1592 = vor.u32 1.1754944e-38, %v1591
    %v1593 = vsel %vm1590, %v1592, %v1588
    %v1594 = vmul.f32 1.0, %v1593
    %v1595 = vmul.f32 %v1574, %v1445
    %v1596 = vmul.f32 %v1555, %v1575
    %v1597 = vadd.f32 %v1595, %v1596
    %v1598 = vtanh.pop %v1597
    %v1599 = vmul.f32 %v1594, %v1598
    %1600 = vst [vmem:[#allocation14 + $0x28] sm:$0xff] %v1599
    %v1601 = vld [vmem:[#allocation2 + $0xc0] sm:$0xff]
    %v1602 = vld [vmem:[#allocation2 + $0xc8] sm:$0xff]
    %v1603 = vld [vmem:[#allocation2 + $0xd0] sm:$0xff]
    %v1604 = vld [vmem:[#allocation2 + $0xd8] sm:$0xff]
    %1605 = vmatpush.msra.mxu0 %v683
    %1606 = vmatpush.msra.mxu0 %v679
    %1607 = vmatpush.msra.mxu0 %v675
    %1608 = vmatpush.msra.mxu0 %v671
    %1609 = vmatpush.msra.mxu0 %v667
    %1610 = vmatpush.msra.mxu0 %v663
    %1611 = vmatpush.msra.mxu0 %v659
    %1612 = vmatpush.msra.mxu0 %v655
    %1613 = vmatpush.msra.mxu0 %v651
    %1614 = vmatpush.msra.mxu0 %v647
    %1615 = vmatpush.msra.mxu0 %v643
    %1616 = vmatpush.msra.mxu0 %v639
    %1617 = vmatpush.msra.mxu0 %v635
    %1618 = vmatpush.msra.mxu0 %v631
    %1619 = vmatpush.msra.mxu0 %v627
    %1620 = vmatpush.msra.mxu0 %v623
    %1621 = vmatmul.f32.gmra.mxu0 %v1599
    %v1622 = vpop.f32.mrf.mxu0
    %v1623 = vadd.f32 0.0, %v1622
    %1624 = vdwg.mxu0
    %1625 = vmatpush.msra.mxu0 %v684
    %1626 = vmatpush.msra.mxu0 %v680
    %1627 = vmatpush.msra.mxu0 %v676
    %1628 = vmatpush.msra.mxu0 %v672
    %1629 = vmatpush.msra.mxu0 %v668
    %1630 = vmatpush.msra.mxu0 %v664
    %1631 = vmatpush.msra.mxu0 %v660
    %1632 = vmatpush.msra.mxu0 %v656
    %1633 = vmatpush.msra.mxu0 %v652
    %1634 = vmatpush.msra.mxu0 %v648
    %1635 = vmatpush.msra.mxu0 %v644
    %1636 = vmatpush.msra.mxu0 %v640
    %1637 = vmatpush.msra.mxu0 %v636
    %1638 = vmatpush.msra.mxu0 %v632
    %1639 = vmatpush.msra.mxu0 %v628
    %1640 = vmatpush.msra.mxu0 %v624
    %1641 = vmatmul.f32.gmra.mxu0 %v1599
    %v1642 = vpop.f32.mrf.mxu0
    %v1643 = vadd.f32 0.0, %v1642
    %1644 = vdwg.mxu0
    %1645 = vmatpush.msra.mxu0 %v685
    %1646 = vmatpush.msra.mxu0 %v681
    %1647 = vmatpush.msra.mxu0 %v677
    %1648 = vmatpush.msra.mxu0 %v673
    %1649 = vmatpush.msra.mxu0 %v669
    %1650 = vmatpush.msra.mxu0 %v665
    %1651 = vmatpush.msra.mxu0 %v661
    %1652 = vmatpush.msra.mxu0 %v657
    %1653 = vmatpush.msra.mxu0 %v653
    %1654 = vmatpush.msra.mxu0 %v649
    %1655 = vmatpush.msra.mxu0 %v645
    %1656 = vmatpush.msra.mxu0 %v641
    %1657 = vmatpush.msra.mxu0 %v637
    %1658 = vmatpush.msra.mxu0 %v633
    %1659 = vmatpush.msra.mxu0 %v629
    %1660 = vmatpush.msra.mxu0 %v625
    %1661 = vmatmul.f32.gmra.mxu0 %v1599
    %v1662 = vpop.f32.mrf.mxu0
    %v1663 = vadd.f32 0.0, %v1662
    %1664 = vdwg.mxu0
    %1665 = vmatpush.msra.mxu0 %v686
    %1666 = vmatpush.msra.mxu0 %v682
    %1667 = vmatpush.msra.mxu0 %v678
    %1668 = vmatpush.msra.mxu0 %v674
    %1669 = vmatpush.msra.mxu0 %v670
    %1670 = vmatpush.msra.mxu0 %v666
    %1671 = vmatpush.msra.mxu0 %v662
    %1672 = vmatpush.msra.mxu0 %v658
    %1673 = vmatpush.msra.mxu0 %v654
    %1674 = vmatpush.msra.mxu0 %v650
    %1675 = vmatpush.msra.mxu0 %v646
    %1676 = vmatpush.msra.mxu0 %v642
    %1677 = vmatpush.msra.mxu0 %v638
    %1678 = vmatpush.msra.mxu0 %v634
    %1679 = vmatpush.msra.mxu0 %v630
    %1680 = vmatpush.msra.mxu0 %v626
    %1681 = vmatmul.f32.gmra.mxu0 %v1599
    %v1682 = vpop.f32.mrf.mxu0
    %v1683 = vadd.f32 0.0, %v1682
    %1684 = vdwg.mxu0
    %v1685 = vadd.f32 %v1601, %v1623
    %v1686 = vadd.f32 %v1602, %v1643
    %v1687 = vadd.f32 %v1603, %v1663
    %v1688 = vadd.f32 %v1604, %v1683
    %v1689 = vxor.u32 %v1685, 2147483648
    %v1690 = vmul.f32 %v1689, 1.442695
    %v1691 = vpow.pop %v1690
    %v1692 = vadd.f32 %v1691, 1.0
    %v1693 = vrcp.pop %v1692
    %v1694 = vmul.f32 %v1692, %v1693
    %v1695 = vsub.f32 1.0, %v1694
    %v1696 = vmul.f32 %v1693, %v1695
    %v1697 = vadd.f32 %v1693, %v1696
    %vm1698 = vweird.f32 %v1692
    %vm1699 = vweird.f32 %v1693
    %vm1700 = vmor %vm1698, %vm1699
    %v1701 = vsel %vm1700, %v1693, %v1697
    %v1702 = vand.u32 2147483647, %v1692
    %vm1703 = vcmp.eq.f32.partialorder %v1702, 8.507059e+37
    %v1704 = vand.u32 %v1692, 2147483648
    %v1705 = vor.u32 1.1754944e-38, %v1704
    %v1706 = vsel %vm1703, %v1705, %v1701
    %v1707 = vmul.f32 1.0, %v1706
    %v1708 = vxor.u32 %v1686, 2147483648
    %v1709 = vmul.f32 %v1708, 1.442695
    %v1710 = vpow.pop %v1709
    %v1711 = vadd.f32 %v1710, 1.0
    %v1712 = vrcp.pop %v1711
    %v1713 = vmul.f32 %v1711, %v1712
    %v1714 = vsub.f32 1.0, %v1713
    %v1715 = vmul.f32 %v1712, %v1714
    %v1716 = vadd.f32 %v1712, %v1715
    %vm1717 = vweird.f32 %v1711
    %vm1718 = vweird.f32 %v1712
    %vm1719 = vmor %vm1717, %vm1718
    %v1720 = vsel %vm1719, %v1712, %v1716
    %v1721 = vand.u32 2147483647, %v1711
    %vm1722 = vcmp.eq.f32.partialorder %v1721, 8.507059e+37
    %v1723 = vand.u32 %v1711, 2147483648
    %v1724 = vor.u32 1.1754944e-38, %v1723
    %v1725 = vsel %vm1722, %v1724, %v1720
    %v1726 = vmul.f32 1.0, %v1725
    %v1727 = vtanh.pop %v1687
    %v1728 = vxor.u32 %v1688, 2147483648
    %v1729 = vmul.f32 %v1728, 1.442695
    %v1730 = vpow.pop %v1729
    %v1731 = vadd.f32 %v1730, 1.0
    %v1732 = vrcp.pop %v1731
    %v1733 = vmul.f32 %v1731, %v1732
    %v1734 = vsub.f32 1.0, %v1733
    %v1735 = vmul.f32 %v1732, %v1734
    %v1736 = vadd.f32 %v1732, %v1735
    %vm1737 = vweird.f32 %v1731
    %vm1738 = vweird.f32 %v1732
    %vm1739 = vmor %vm1737, %vm1738
    %v1740 = vsel %vm1739, %v1732, %v1736
    %v1741 = vand.u32 2147483647, %v1731
    %vm1742 = vcmp.eq.f32.partialorder %v1741, 8.507059e+37
    %v1743 = vand.u32 %v1731, 2147483648
    %v1744 = vor.u32 1.1754944e-38, %v1743
    %v1745 = vsel %vm1742, %v1744, %v1740
    %v1746 = vmul.f32 1.0, %v1745
    %v1747 = vmul.f32 %v1726, %v1597
    %v1748 = vmul.f32 %v1707, %v1727
    %v1749 = vadd.f32 %v1747, %v1748
    %v1750 = vtanh.pop %v1749
    %v1751 = vmul.f32 %v1746, %v1750
    %1752 = vst [vmem:[#allocation14 + $0x30] sm:$0xff] %v1751
    %v1753 = vld [vmem:[#allocation2 + $0xe0] sm:$0xff]
    %v1754 = vld [vmem:[#allocation2 + $0xe8] sm:$0xff]
    %v1755 = vld [vmem:[#allocation2 + $0xf0] sm:$0xff]
    %v1756 = vld [vmem:[#allocation2 + $0xf8] sm:$0xff]
    %1757 = vmatpush.msra.mxu0 %v683
    %1758 = vmatpush.msra.mxu0 %v679
    %1759 = vmatpush.msra.mxu0 %v675
    %1760 = vmatpush.msra.mxu0 %v671
    %1761 = vmatpush.msra.mxu0 %v667
    %1762 = vmatpush.msra.mxu0 %v663
    %1763 = vmatpush.msra.mxu0 %v659
    %1764 = vmatpush.msra.mxu0 %v655
    %1765 = vmatpush.msra.mxu0 %v651
    %1766 = vmatpush.msra.mxu0 %v647
    %1767 = vmatpush.msra.mxu0 %v643
    %1768 = vmatpush.msra.mxu0 %v639
    %1769 = vmatpush.msra.mxu0 %v635
    %1770 = vmatpush.msra.mxu0 %v631
    %1771 = vmatpush.msra.mxu0 %v627
    %1772 = vmatpush.msra.mxu0 %v623
    %1773 = vmatmul.f32.gmra.mxu0 %v1751
    %v1774 = vpop.f32.mrf.mxu0
    %v1775 = vadd.f32 0.0, %v1774
    %1776 = vdwg.mxu0
    %1777 = vmatpush.msra.mxu0 %v684
    %1778 = vmatpush.msra.mxu0 %v680
    %1779 = vmatpush.msra.mxu0 %v676
    %1780 = vmatpush.msra.mxu0 %v672
    %1781 = vmatpush.msra.mxu0 %v668
    %1782 = vmatpush.msra.mxu0 %v664
    %1783 = vmatpush.msra.mxu0 %v660
    %1784 = vmatpush.msra.mxu0 %v656
    %1785 = vmatpush.msra.mxu0 %v652
    %1786 = vmatpush.msra.mxu0 %v648
    %1787 = vmatpush.msra.mxu0 %v644
    %1788 = vmatpush.msra.mxu0 %v640
    %1789 = vmatpush.msra.mxu0 %v636
    %1790 = vmatpush.msra.mxu0 %v632
    %1791 = vmatpush.msra.mxu0 %v628
    %1792 = vmatpush.msra.mxu0 %v624
    %1793 = vmatmul.f32.gmra.mxu0 %v1751
    %v1794 = vpop.f32.mrf.mxu0
    %v1795 = vadd.f32 0.0, %v1794
    %1796 = vdwg.mxu0
    %1797 = vmatpush.msra.mxu0 %v685
    %1798 = vmatpush.msra.mxu0 %v681
    %1799 = vmatpush.msra.mxu0 %v677
    %1800 = vmatpush.msra.mxu0 %v673
    %1801 = vmatpush.msra.mxu0 %v669
    %1802 = vmatpush.msra.mxu0 %v665
    %1803 = vmatpush.msra.mxu0 %v661
    %1804 = vmatpush.msra.mxu0 %v657
    %1805 = vmatpush.msra.mxu0 %v653
    %1806 = vmatpush.msra.mxu0 %v649
    %1807 = vmatpush.msra.mxu0 %v645
    %1808 = vmatpush.msra.mxu0 %v641
    %1809 = vmatpush.msra.mxu0 %v637
    %1810 = vmatpush.msra.mxu0 %v633
    %1811 = vmatpush.msra.mxu0 %v629
    %1812 = vmatpush.msra.mxu0 %v625
    %1813 = vmatmul.f32.gmra.mxu0 %v1751
    %v1814 = vpop.f32.mrf.mxu0
    %v1815 = vadd.f32 0.0, %v1814
    %1816 = vdwg.mxu0
    %1817 = vmatpush.msra.mxu0 %v686
    %1818 = vmatpush.msra.mxu0 %v682
    %1819 = vmatpush.msra.mxu0 %v678
    %1820 = vmatpush.msra.mxu0 %v674
    %1821 = vmatpush.msra.mxu0 %v670
    %1822 = vmatpush.msra.mxu0 %v666
    %1823 = vmatpush.msra.mxu0 %v662
    %1824 = vmatpush.msra.mxu0 %v658
    %1825 = vmatpush.msra.mxu0 %v654
    %1826 = vmatpush.msra.mxu0 %v650
    %1827 = vmatpush.msra.mxu0 %v646
    %1828 = vmatpush.msra.mxu0 %v642
    %1829 = vmatpush.msra.mxu0 %v638
    %1830 = vmatpush.msra.mxu0 %v634
    %1831 = vmatpush.msra.mxu0 %v630
    %1832 = vmatpush.msra.mxu0 %v626
    %1833 = vmatmul.f32.gmra.mxu0 %v1751
    %v1834 = vpop.f32.mrf.mxu0
    %v1835 = vadd.f32 0.0, %v1834
    %1836 = vdwg.mxu0
    %v1837 = vadd.f32 %v1753, %v1775
    %v1838 = vadd.f32 %v1754, %v1795
    %v1839 = vadd.f32 %v1755, %v1815
    %v1840 = vadd.f32 %v1756, %v1835
    %v1841 = vxor.u32 %v1837, 2147483648
    %v1842 = vmul.f32 %v1841, 1.442695
    %v1843 = vpow.pop %v1842
    %v1844 = vadd.f32 %v1843, 1.0
    %v1845 = vrcp.pop %v1844
    %v1846 = vmul.f32 %v1844, %v1845
    %v1847 = vsub.f32 1.0, %v1846
    %v1848 = vmul.f32 %v1845, %v1847
    %v1849 = vadd.f32 %v1845, %v1848
    %vm1850 = vweird.f32 %v1844
    %vm1851 = vweird.f32 %v1845
    %vm1852 = vmor %vm1850, %vm1851
    %v1853 = vsel %vm1852, %v1845, %v1849
    %v1854 = vand.u32 2147483647, %v1844
    %vm1855 = vcmp.eq.f32.partialorder %v1854, 8.507059e+37
    %v1856 = vand.u32 %v1844, 2147483648
    %v1857 = vor.u32 1.1754944e-38, %v1856
    %v1858 = vsel %vm1855, %v1857, %v1853
    %v1859 = vmul.f32 1.0, %v1858
    %v1860 = vxor.u32 %v1838, 2147483648
    %v1861 = vmul.f32 %v1860, 1.442695
    %v1862 = vpow.pop %v1861
    %v1863 = vadd.f32 %v1862, 1.0
    %v1864 = vrcp.pop %v1863
    %v1865 = vmul.f32 %v1863, %v1864
    %v1866 = vsub.f32 1.0, %v1865
    %v1867 = vmul.f32 %v1864, %v1866
    %v1868 = vadd.f32 %v1864, %v1867
    %vm1869 = vweird.f32 %v1863
    %vm1870 = vweird.f32 %v1864
    %vm1871 = vmor %vm1869, %vm1870
    %v1872 = vsel %vm1871, %v1864, %v1868
    %v1873 = vand.u32 2147483647, %v1863
    %vm1874 = vcmp.eq.f32.partialorder %v1873, 8.507059e+37
    %v1875 = vand.u32 %v1863, 2147483648
    %v1876 = vor.u32 1.1754944e-38, %v1875
    %v1877 = vsel %vm1874, %v1876, %v1872
    %v1878 = vmul.f32 1.0, %v1877
    %v1879 = vtanh.pop %v1839
    %v1880 = vxor.u32 %v1840, 2147483648
    %v1881 = vmul.f32 %v1880, 1.442695
    %v1882 = vpow.pop %v1881
    %v1883 = vadd.f32 %v1882, 1.0
    %v1884 = vrcp.pop %v1883
    %v1885 = vmul.f32 %v1883, %v1884
    %v1886 = vsub.f32 1.0, %v1885
    %v1887 = vmul.f32 %v1884, %v1886
    %v1888 = vadd.f32 %v1884, %v1887
    %vm1889 = vweird.f32 %v1883
    %vm1890 = vweird.f32 %v1884
    %vm1891 = vmor %vm1889, %vm1890
    %v1892 = vsel %vm1891, %v1884, %v1888
    %v1893 = vand.u32 2147483647, %v1883
    %vm1894 = vcmp.eq.f32.partialorder %v1893, 8.507059e+37
    %v1895 = vand.u32 %v1883, 2147483648
    %v1896 = vor.u32 1.1754944e-38, %v1895
    %v1897 = vsel %vm1894, %v1896, %v1892
    %v1898 = vmul.f32 1.0, %v1897
    %v1899 = vmul.f32 %v1878, %v1749
    %v1900 = vmul.f32 %v1859, %v1879
    %v1901 = vadd.f32 %v1899, %v1900
    %v1902 = vtanh.pop %v1901
    %v1903 = vmul.f32 %v1898, %v1902
    %1904 = vst [vmem:[#allocation14 + $0x38] sm:$0xff] %v1903
    // Predicated region
    $region50: #{tpu_custom_call.1} parent=1 // pred_check
      _
    $region51: #{tpu_custom_call.1} parent=1 // pred_check_branch
      %1906 = sbr.rel (0) target = $region53
    $region52: #{tpu_custom_call.1} parent=1 // pred_region
      %1908 = vsyncadd [#allocation5], 0
      %s1909 = sshll.u32 [#allocation14], 4
      %s1910 = int_to_ptr.vmem [resolvable:$true] %s1909
      %s1911 = sshll.u32 %s6, 4
      %s1912 = int_to_ptr.hbm [resolvable:$true] %s1911
      %1917 = dma.vmem_to_hbm [thread:$0]  %s1910, 1024, %s1912, [#allocation5], 128, 128, 8
    $region53: #{tpu_custom_call.1} parent=1 // pred_fallthru
      _
    // Predicated region
    $region54: #{tpu_custom_call.1} parent=1 // pred_check
      _
    $region55: #{tpu_custom_call.1} parent=1 // pred_check_branch
      %1919 = sbr.rel (0) target = $region57
    $region56: #{tpu_custom_call.1} parent=1 // pred_region
      %1921 = dma.done [#allocation5], 1024
    $region57: #{tpu_custom_call.1} parent=1 // pred_fallthru
      _
    %1922 = vsyncpa [#allocation4], 1
    %1923 = vsyncpa [#allocation7], 1
    %1924 = vsyncpa [#allocation10], 1
    %1925 = vsyncpa [#allocation13], 1
    %1926 = vsyncpa [#allocation5], 1

</llo_original>
